<compile_context>
chip_gen: v5e
topology: v5e:2x2
jax: 0.10.0
libtpu: 0.0.40
codegen_flags: <defaults>
</compile_context>

<pallas_src>
from functools import partial

import numpy as np
import jax
import jax.numpy as jnp
from jax import lax
from jax.experimental import pallas as pl
from jax.experimental.pallas import tpu as pltpu

BN_EPS = 1e-5
NUM_CLASSES = 10
LANE_PAD = 128           # lane-dense output width (wrapper slices back to 10)


# ----------------------------------- kernel -------------------------------------------

def _net_kernel(x_ref, w1_ref, s1_ref, b1_ref, w2_ref, s2_ref, b2_ref,
                w3_ref, she_ref, sho_ref, swe_ref, swo_ref,
                w4_ref, s4_ref, b4_ref, w5_ref, s5_ref, b5_ref,
                sg_ref, whead_ref, o_ref):
    f32, bf16 = jnp.float32, jnp.bfloat16

    def dot(a, b):
        return jnp.dot(a, b, preferred_element_type=f32)

    def conv3x3_relu_bn(a, w_ref, s_ref, b_ref):
        # a: f32 (M, Win*Cin) stacked rows; w_ref: bf16 (3, Win*Cin, Wout*Cout) Toeplitz slabs.
        m = a.shape[0] - 2
        acc = dot(a[0:m].astype(bf16), w_ref[0])
        acc = acc + dot(a[1:m + 1].astype(bf16), w_ref[1])
        acc = acc + dot(a[2:m + 2].astype(bf16), w_ref[2])
        acc = jnp.maximum(acc, 0.0)                    # ReLU          (f32)
        return acc * s_ref[...] + b_ref[...]           # folded eval BN (f32)

    # Stacked layout: rows = B samples x 16 image rows, lanes = width-major/channel-minor.
    x = x_ref[0].astype(f32)                            # (16B, 16)
    a1 = conv3x3_relu_bn(x, w1_ref, s1_ref, b1_ref)     # (16B-2, 14*8)   convblock1
    a2 = conv3x3_relu_bn(a1, w2_ref, s2_ref, b2_ref)    # (16B-4, 12*16)  convblock2
    a3 = dot(a2.astype(bf16), w3_ref[...])              # (16B-4, 12*10)  convblock3 (1x1)

    # 2x2 maxpool: row-pair max + per-sample row compaction via two independent 0/1
    # selector matmuls, then lane-block-pair max via two independent selector matmuls.
    a3b = a3.astype(bf16)
    rows = jnp.maximum(dot(she_ref[...], a3b),
                       dot(sho_ref[...], a3b))          # (6B, 120)
    rb = rows.astype(bf16)
    pooled = jnp.maximum(dot(rb, swe_ref[...]),
                         dot(rb, swo_ref[...]))         # (6B, 6*10)

    a4 = conv3x3_relu_bn(pooled, w4_ref, s4_ref, b4_ref)  # (6B-2, 4*16)  convblock4
    a5 = conv3x3_relu_bn(a4, w5_ref, s5_ref, b5_ref)      # (6B-4, 2*16)  convblock5

    # GAP (mean over 2x2) + 1x1 head, folded into whead (= 0.25*[w6;w6], lane-padded).
    g = dot(sg_ref[...], a5.astype(bf16))               # (B, 32) per-sample row sums
    logits = dot(g.astype(bf16), whead_ref[...])        # (B, 128), lanes >= 10 are zero

    # log_softmax over the first 10 lanes (f32), pad lanes zeroed; single lane-dense store.
    lane = lax.broadcasted_iota(jnp.int32, logits.shape, 1)
    valid = lane < NUM_CLASSES
    zl = jnp.where(valid, logits, -1e30)
    m = jnp.max(zl, axis=-1, keepdims=True)
    z = zl - m
    p = jnp.where(valid, jnp.exp(z), 0.0)
    lse = jnp.log(jnp.sum(p, axis=-1, keepdims=True))
    o_ref[0] = jnp.where(valid, z - lse, 0.0)


# ----------------------------------- wrapper ------------------------------------------

def _const_spec(a):
    idx = (0,) * a.ndim
    return pl.BlockSpec(a.shape, lambda n, _i=idx: _i)


@partial(jax.jit, static_argnames=("block_b",))
def net_forward(packed, x_nchw, *, block_b=4):
    N, cin, H, W = x_nchw.shape                 # (N, 1, 16, 16), NCHW like the torch module
    B = int(min(block_b, N))                    # samples stacked per grid step
    G = (N + B - 1) // B
    n_pad = G * B
    x_rows = x_nchw.reshape(N, H, W * cin)      # lane index = w*Cin + ci  (Cin == 1)
    if n_pad != N:
        x_rows = jnp.concatenate(
            [x_rows, jnp.zeros((n_pad - N, H, W * cin), x_rows.dtype)], axis=0)
    x_stack = x_rows.reshape(G, B * H, W * cin)

    she, sho, sg = _stacked_row_selectors(B)    # B-dependent row selectors (bf16 constants)
    params = (packed["w1"], packed["s1"], packed["b1"],
              packed["w2"], packed["s2"], packed["b2"],
              packed["w3"], she, sho, packed["swe"], packed["swo"],
              packed["w4"], packed["s4"], packed["b4"],
              packed["w5"], packed["s5"], packed["b5"],
              sg, packed["whead"])

    out = pl.pallas_call(
        _net_kernel,
        out_shape=jax.ShapeDtypeStruct((G, B, LANE_PAD), jnp.float32),
        grid_spec=pltpu.PrefetchScalarGridSpec(
            num_scalar_prefetch=0,
            grid=(G,),
            in_specs=[pl.BlockSpec((1, B * H, W * cin), lambda g: (g, 0, 0))]
                     + [_const_spec(p) for p in params],
            out_specs=pl.BlockSpec((1, B, LANE_PAD), lambda g: (g, 0, 0)),
        ),
        compiler_params=pltpu.CompilerParams(dimension_semantics=("parallel",)),
    )(x_stack, *params)
    return out.reshape(n_pad, LANE_PAD)[:N, :NUM_CLASSES]


# ---------------------------- parameter construction ----------------------------------

def _conv_hwio(key, kh, kw, cin, cout):
    std = (2.0 / (kh * kw * cin)) ** 0.5
    return std * jax.random.normal(key, (kh, kw, cin, cout), jnp.float32)


def _bn_fold(key, c):
    k1, k2, k3, k4 = jax.random.split(key, 4)
    gamma = 1.0 + 0.1 * jax.random.normal(k1, (c,), jnp.float32)
    beta = 0.1 * jax.random.normal(k2, (c,), jnp.float32)
    mean = 0.1 * jax.random.normal(k3, (c,), jnp.float32)
    var = 1.0 + 0.5 * jax.random.uniform(k4, (c,), jnp.float32)
    scale = gamma / jnp.sqrt(var + BN_EPS)
    bias = beta - mean * scale
    return scale, bias


def _toeplitz3x3(w_hwio, w_in):
    """(3,3,Cin,Cout) HWIO conv weight -> bf16 (3, w_in*Cin, w_out*Cout) row-matmul slabs."""
    kh, kw, cin, cout = w_hwio.shape
    w_out = w_in - kw + 1
    wnp = np.asarray(w_hwio, np.float32)
    big = np.zeros((kh, w_in * cin, w_out * cout), np.float32)
    for dy in range(kh):
        for dx in range(kw):
            for w in range(w_out):
                big[dy, (w + dx) * cin:(w + dx + 1) * cin,
                    w * cout:(w + 1) * cout] = wnp[dy, dx]
    return jnp.asarray(big, jnp.bfloat16)


def _blockdiag1x1(w_io, spatial_w):
    cin, cout = w_io.shape
    wnp = np.asarray(w_io, np.float32)
    big = np.zeros((spatial_w * cin, spatial_w * cout), np.float32)
    for w in range(spatial_w):
        big[w * cin:(w + 1) * cin, w * cout:(w + 1) * cout] = wnp
    return jnp.asarray(big, jnp.bfloat16)


def _tile_cols(v, w_out):
    # BN scale/bias stay f32 (epilogue math is f32 on all chip generations).
    return jnp.asarray(np.tile(np.asarray(v, np.float32), w_out).reshape(1, -1))


def _lane_pool_selectors(w_in, c):
    """0/1 selectors for the lane half of the 2x2 maxpool (even / odd width blocks)."""
    w_out = w_in // 2
    swe = np.zeros((w_in * c, w_out * c), np.float32)
    swo = np.zeros((w_in * c, w_out * c), np.float32)
    eye = np.eye(c, dtype=np.float32)
    for j in range(w_out):
        swe[(2 * j) * c:(2 * j + 1) * c, j * c:(j + 1) * c] = eye
        swo[(2 * j + 1) * c:(2 * j + 2) * c, j * c:(j + 1) * c] = eye
    return jnp.asarray(swe, jnp.bfloat16), jnp.asarray(swo, jnp.bfloat16)


def _stacked_row_selectors(b):
    """Row selectors for B samples stacked along sublanes (per-sample slot stride 16).

    she/sho: pool even/odd rows of the conv3 output (rows 16*b + 2i / 2i+1) AND compact
             sample b to rows 6*b + i of the pooled stack (so they double as de-stacking).
    sg:      GAP row-sum selector over the two valid conv5 output rows of each sample.
    """
    h_pool = 6
    rows_a3 = 16 * b - 4                      # rows of the stacked conv3 output
    she = np.zeros((h_pool * b, rows_a3), np.float32)
    sho = np.zeros((h_pool * b, rows_a3), np.float32)
    for s in range(b):
        for i in range(h_pool):
            she[s * h_pool + i, s * 16 + 2 * i] = 1.0
            sho[s * h_pool + i, s * 16 + 2 * i + 1] = 1.0
    rows_a5 = h_pool * b - 4                  # rows of the stacked conv5 output
    sg = np.zeros((b, rows_a5), np.float32)
    for s in range(b):
        sg[s, s * h_pool + 0] = 1.0
        sg[s, s * h_pool + 1] = 1.0
    return (jnp.asarray(she, jnp.bfloat16), jnp.asarray(sho, jnp.bfloat16),
            jnp.asarray(sg, jnp.bfloat16))


def _head_weight(w6, w_c5):
    """GAP (mean over w_c5 x w_c5) + 1x1 head folded into one lane-padded matrix."""
    stacked = np.concatenate([np.asarray(w6, np.float32)] * w_c5, axis=0) / (w_c5 * w_c5)
    big = np.zeros((stacked.shape[0], LANE_PAD), np.float32)
    big[:, :stacked.shape[1]] = stacked
    return jnp.asarray(big, jnp.bfloat16)


def init_params(key, w_in=16):
    ks = jax.random.split(key, 10)
    # Raw module parameters (HWIO conv weights, folded eval-mode BN scale/bias).
    w1 = _conv_hwio(ks[0], 3, 3, 1, 8)
    s1, b1 = _bn_fold(ks[1], 8)
    w2 = _conv_hwio(ks[2], 3, 3, 8, 16)
    s2, b2 = _bn_fold(ks[3], 16)
    w3 = _conv_hwio(ks[4], 1, 1, 16, 10)
    w4 = _conv_hwio(ks[5], 3, 3, 10, 16)
    s4, b4 = _bn_fold(ks[6], 16)
    w5 = _conv_hwio(ks[7], 3, 3, 16, 16)
    s5, b5 = _bn_fold(ks[8], 16)
    w6 = _conv_hwio(ks[9], 1, 1, 16, 10).reshape(16, 10)

    # Spatial widths along the forward pass (square images, valid convs, 2x2 pool).
    w_c1 = w_in - 2      # 14
    w_c2 = w_c1 - 2      # 12
    w_pool = w_c2 // 2   # 6
    w_c4 = w_pool - 2    # 4
    w_c5 = w_c4 - 2      # 2

    swe, swo = _lane_pool_selectors(w_c2, 10)
    packed = {
        "w1": _toeplitz3x3(w1, w_in), "s1": _tile_cols(s1, w_c1), "b1": _tile_cols(b1, w_c1),
        "w2": _toeplitz3x3(w2, w_c1), "s2": _tile_cols(s2, w_c2), "b2": _tile_cols(b2, w_c2),
        "w3": _blockdiag1x1(w3.reshape(16, 10), w_c2),
        "swe": swe, "swo": swo,
        "w4": _toeplitz3x3(w4, w_pool), "s4": _tile_cols(s4, w_c4), "b4": _tile_cols(b4, w_c4),
        "w5": _toeplitz3x3(w5, w_c4), "s5": _tile_cols(s5, w_c5), "b5": _tile_cols(b5, w_c5),
        "whead": _head_weight(w6, w_c5),
    }
    raw = {"w1": w1, "s1": s1, "b1": b1, "w2": w2, "s2": s2, "b2": b2, "w3": w3,
           "w4": w4, "s4": s4, "b4": b4, "w5": w5, "s5": s5, "b5": b5, "w6": w6}
    return packed, raw


# ------------------------------ pure-JAX reference -------------------------------------

def reference_forward(raw, x):
    def conv(y, w):
        return lax.conv_general_dilated(y, w, (1, 1), "VALID",
                                        dimension_numbers=("NCHW", "HWIO", "NCHW"))

    def bn(y, s, b):
        return y * s.reshape(1, -1, 1, 1) + b.reshape(1, -1, 1, 1)

    y = bn(jnp.maximum(conv(x, raw["w1"]), 0.0), raw["s1"], raw["b1"])
    y = bn(jnp.maximum(conv(y, raw["w2"]), 0.0), raw["s2"], raw["b2"])
    y = conv(y, raw["w3"])
    y = lax.reduce_window(y, -jnp.inf, lax.max, (1, 1, 2, 2), (1, 1, 2, 2), "VALID")
    y = bn(jnp.maximum(conv(y, raw["w4"]), 0.0), raw["s4"], raw["b4"])
    y = bn(jnp.maximum(conv(y, raw["w5"]), 0.0), raw["s5"], raw["b5"])
    g = jnp.mean(y, axis=(2, 3))                # GAP -> (N, 16)
    logits = g @ raw["w6"]                      # convblock6 (1x1) -> (N, 10)
    return jax.nn.log_softmax(logits, axis=-1)


# ------------------------------------- main --------------------------------------------

if __name__ == "__main__":
    key = jax.random.PRNGKey(0)
    pkey, xkey = jax.random.split(key)
    packed, raw = init_params(pkey)

    # N=8 exercises the batched path with 2 parallel grid steps (4 samples per step);
    # N=2 exercises the small-batch path (single grid step, 2 samples).
    for n in (8, 2):
        x = jax.random.normal(jax.random.fold_in(xkey, n), (n, 1, 16, 16), jnp.float32)
        out = jax.block_until_ready(net_forward(packed, x, block_b=4))
        assert out.shape == (n, 10)
        assert bool(jnp.all(jnp.isfinite(out)))
        # rows of log_softmax should sum (in prob space) to ~1
        assert bool(jnp.allclose(jnp.sum(jnp.exp(out), axis=-1), 1.0, atol=1e-5))
        # numerical check against a pure-f32 JAX reference of the module
        # (kernel uses bf16 matmul inputs with f32 accumulation -> looser tolerance)
        ref = jax.block_until_ready(reference_forward(raw, x))
        max_err = float(jnp.max(jnp.abs(out - ref)))
        mean_err = float(jnp.mean(jnp.abs(out - ref)))
        assert max_err < 1.2e-1, max_err
        assert mean_err < 3e-2, mean_err

    print("KERNEL_OK")
</pallas_src>

<mosaic_0001>
module attributes {stable_mosaic.version = 11 : i64} {
  func.func @_net_kernel(%arg0: i32, %arg1: memref<1x64x16xf32, #tpu.memory_space<vmem>>, %arg2: memref<3x16x112xbf16, #tpu.memory_space<vmem>>, %arg3: memref<1x112xf32, #tpu.memory_space<vmem>>, %arg4: memref<1x112xf32, #tpu.memory_space<vmem>>, %arg5: memref<3x112x192xbf16, #tpu.memory_space<vmem>>, %arg6: memref<1x192xf32, #tpu.memory_space<vmem>>, %arg7: memref<1x192xf32, #tpu.memory_space<vmem>>, %arg8: memref<192x120xbf16, #tpu.memory_space<vmem>>, %arg9: memref<24x60xbf16, #tpu.memory_space<vmem>>, %arg10: memref<24x60xbf16, #tpu.memory_space<vmem>>, %arg11: memref<120x60xbf16, #tpu.memory_space<vmem>>, %arg12: memref<120x60xbf16, #tpu.memory_space<vmem>>, %arg13: memref<3x60x64xbf16, #tpu.memory_space<vmem>>, %arg14: memref<1x64xf32, #tpu.memory_space<vmem>>, %arg15: memref<1x64xf32, #tpu.memory_space<vmem>>, %arg16: memref<3x64x32xbf16, #tpu.memory_space<vmem>>, %arg17: memref<1x32xf32, #tpu.memory_space<vmem>>, %arg18: memref<1x32xf32, #tpu.memory_space<vmem>>, %arg19: memref<4x20xbf16, #tpu.memory_space<vmem>>, %arg20: memref<32x128xbf16, #tpu.memory_space<vmem>>, %arg21: memref<1x4x128xf32, #tpu.memory_space<vmem>>) attributes {dimension_semantics = [#tpu.dimension_semantics<parallel>], iteration_bounds = array<i64: 2>, scalar_prefetch = 0 : i64, scratch_operands = 0 : i64, tpu.core_type = #tpu.core_type<tc>, window_params = [{transform_indices = @transform_0, window_bounds = array<i64: 1, 64, 16>}, {pipeline_mode = #tpu.pipeline_mode<synchronous>, transform_indices = @transform_1, window_bounds = array<i64: 3, 16, 112>}, {pipeline_mode = #tpu.pipeline_mode<synchronous>, transform_indices = @transform_2, window_bounds = array<i64: 1, 112>}, {pipeline_mode = #tpu.pipeline_mode<synchronous>, transform_indices = @transform_3, window_bounds = array<i64: 1, 112>}, {pipeline_mode = #tpu.pipeline_mode<synchronous>, transform_indices = @transform_4, window_bounds = array<i64: 3, 112, 192>}, {pipeline_mode = #tpu.pipeline_mode<synchronous>, transform_indices = @transform_5, window_bounds = array<i64: 1, 192>}, {pipeline_mode = #tpu.pipeline_mode<synchronous>, transform_indices = @transform_6, window_bounds = array<i64: 1, 192>}, {pipeline_mode = #tpu.pipeline_mode<synchronous>, transform_indices = @transform_7, window_bounds = array<i64: 192, 120>}, {pipeline_mode = #tpu.pipeline_mode<synchronous>, transform_indices = @transform_8, window_bounds = array<i64: 24, 60>}, {pipeline_mode = #tpu.pipeline_mode<synchronous>, transform_indices = @transform_9, window_bounds = array<i64: 24, 60>}, {pipeline_mode = #tpu.pipeline_mode<synchronous>, transform_indices = @transform_10, window_bounds = array<i64: 120, 60>}, {pipeline_mode = #tpu.pipeline_mode<synchronous>, transform_indices = @transform_11, window_bounds = array<i64: 120, 60>}, {pipeline_mode = #tpu.pipeline_mode<synchronous>, transform_indices = @transform_12, window_bounds = array<i64: 3, 60, 64>}, {pipeline_mode = #tpu.pipeline_mode<synchronous>, transform_indices = @transform_13, window_bounds = array<i64: 1, 64>}, {pipeline_mode = #tpu.pipeline_mode<synchronous>, transform_indices = @transform_14, window_bounds = array<i64: 1, 64>}, {pipeline_mode = #tpu.pipeline_mode<synchronous>, transform_indices = @transform_15, window_bounds = array<i64: 3, 64, 32>}, {pipeline_mode = #tpu.pipeline_mode<synchronous>, transform_indices = @transform_16, window_bounds = array<i64: 1, 32>}, {pipeline_mode = #tpu.pipeline_mode<synchronous>, transform_indices = @transform_17, window_bounds = array<i64: 1, 32>}, {pipeline_mode = #tpu.pipeline_mode<synchronous>, transform_indices = @transform_18, window_bounds = array<i64: 4, 20>}, {pipeline_mode = #tpu.pipeline_mode<synchronous>, transform_indices = @transform_19, window_bounds = array<i64: 32, 128>}, {transform_indices = @transform_20, window_bounds = array<i64: 1, 4, 128>}]} {
    %c0 = arith.constant 0 : index
    %c0_0 = arith.constant 0 : index
    %c0_1 = arith.constant 0 : index
    %0 = vector.load %arg1[%c0, %c0_0, %c0_1] : memref<1x64x16xf32, #tpu.memory_space<vmem>>, vector<1x64x16xf32>
    %1 = vector.shape_cast %0 : vector<1x64x16xf32> to vector<64x16xf32>
    %2 = vector.extract_strided_slice %1 {offsets = [0, 0], sizes = [62, 16], strides = [1, 1]} : vector<64x16xf32> to vector<62x16xf32>
    %3 = arith.truncf %2 : vector<62x16xf32> to vector<62x16xbf16>
    %c0_2 = arith.constant 0 : index
    %c0_3 = arith.constant 0 : index
    %c0_4 = arith.constant 0 : index
    %4 = vector.load %arg2[%c0_2, %c0_3, %c0_4] : memref<3x16x112xbf16, #tpu.memory_space<vmem>>, vector<1x16x112xbf16>
    %5 = vector.shape_cast %4 : vector<1x16x112xbf16> to vector<16x112xbf16>
    %cst = arith.constant dense<0.000000e+00> : vector<62x112xf32>
    %6 = tpu.matmul %3, %5, %cst {dimension_numbers = #tpu.dot_dimension_numbers<[1], [0], [0], [1], [0, 0, 1, 1], [], []>} : vector<62x16xbf16>, vector<16x112xbf16>, vector<62x112xf32> -> vector<62x112xf32>
    %7 = vector.extract_strided_slice %1 {offsets = [1, 0], sizes = [62, 16], strides = [1, 1]} : vector<64x16xf32> to vector<62x16xf32>
    %8 = arith.truncf %7 : vector<62x16xf32> to vector<62x16xbf16>
    %c1 = arith.constant 1 : index
    %c0_5 = arith.constant 0 : index
    %c0_6 = arith.constant 0 : index
    %9 = vector.load %arg2[%c1, %c0_5, %c0_6] : memref<3x16x112xbf16, #tpu.memory_space<vmem>>, vector<1x16x112xbf16>
    %10 = vector.shape_cast %9 : vector<1x16x112xbf16> to vector<16x112xbf16>
    %cst_7 = arith.constant dense<0.000000e+00> : vector<62x112xf32>
    %11 = tpu.matmul %8, %10, %cst_7 {dimension_numbers = #tpu.dot_dimension_numbers<[1], [0], [0], [1], [0, 0, 1, 1], [], []>} : vector<62x16xbf16>, vector<16x112xbf16>, vector<62x112xf32> -> vector<62x112xf32>
    %12 = arith.addf %6, %11 : vector<62x112xf32>
    %13 = vector.extract_strided_slice %1 {offsets = [2, 0], sizes = [62, 16], strides = [1, 1]} : vector<64x16xf32> to vector<62x16xf32>
    %14 = arith.truncf %13 : vector<62x16xf32> to vector<62x16xbf16>
    %c2 = arith.constant 2 : index
    %c0_8 = arith.constant 0 : index
    %c0_9 = arith.constant 0 : index
    %15 = vector.load %arg2[%c2, %c0_8, %c0_9] : memref<3x16x112xbf16, #tpu.memory_space<vmem>>, vector<1x16x112xbf16>
    %16 = vector.shape_cast %15 : vector<1x16x112xbf16> to vector<16x112xbf16>
    %cst_10 = arith.constant dense<0.000000e+00> : vector<62x112xf32>
    %17 = tpu.matmul %14, %16, %cst_10 {dimension_numbers = #tpu.dot_dimension_numbers<[1], [0], [0], [1], [0, 0, 1, 1], [], []>} : vector<62x16xbf16>, vector<16x112xbf16>, vector<62x112xf32> -> vector<62x112xf32>
    %18 = arith.addf %12, %17 : vector<62x112xf32>
    %cst_11 = arith.constant 0.000000e+00 : f32
    %19 = vector.broadcast %cst_11 : f32 to vector<62x112xf32>
    %20 = arith.maximumf %18, %19 : vector<62x112xf32>
    %c0_12 = arith.constant 0 : index
    %c0_13 = arith.constant 0 : index
    %21 = vector.load %arg3[%c0_12, %c0_13] : memref<1x112xf32, #tpu.memory_space<vmem>>, vector<1x112xf32>
    %22 = vector.broadcast %21 : vector<1x112xf32> to vector<62x112xf32>
    %23 = arith.mulf %20, %22 : vector<62x112xf32>
    %c0_14 = arith.constant 0 : index
    %c0_15 = arith.constant 0 : index
    %24 = vector.load %arg4[%c0_14, %c0_15] : memref<1x112xf32, #tpu.memory_space<vmem>>, vector<1x112xf32>
    %25 = vector.broadcast %24 : vector<1x112xf32> to vector<62x112xf32>
    %26 = arith.addf %23, %25 : vector<62x112xf32>
    %27 = vector.extract_strided_slice %26 {offsets = [0, 0], sizes = [60, 112], strides = [1, 1]} : vector<62x112xf32> to vector<60x112xf32>
    %28 = arith.truncf %27 : vector<60x112xf32> to vector<60x112xbf16>
    %c0_16 = arith.constant 0 : index
    %c0_17 = arith.constant 0 : index
    %c0_18 = arith.constant 0 : index
    %29 = vector.load %arg5[%c0_16, %c0_17, %c0_18] : memref<3x112x192xbf16, #tpu.memory_space<vmem>>, vector<1x112x192xbf16>
    %30 = vector.shape_cast %29 : vector<1x112x192xbf16> to vector<112x192xbf16>
    %cst_19 = arith.constant dense<0.000000e+00> : vector<60x192xf32>
    %31 = tpu.matmul %28, %30, %cst_19 {dimension_numbers = #tpu.dot_dimension_numbers<[1], [0], [0], [1], [0, 0, 1, 1], [], []>} : vector<60x112xbf16>, vector<112x192xbf16>, vector<60x192xf32> -> vector<60x192xf32>
    %32 = vector.extract_strided_slice %26 {offsets = [1, 0], sizes = [60, 112], strides = [1, 1]} : vector<62x112xf32> to vector<60x112xf32>
    %33 = arith.truncf %32 : vector<60x112xf32> to vector<60x112xbf16>
    %c1_20 = arith.constant 1 : index
    %c0_21 = arith.constant 0 : index
    %c0_22 = arith.constant 0 : index
    %34 = vector.load %arg5[%c1_20, %c0_21, %c0_22] : memref<3x112x192xbf16, #tpu.memory_space<vmem>>, vector<1x112x192xbf16>
    %35 = vector.shape_cast %34 : vector<1x112x192xbf16> to vector<112x192xbf16>
    %cst_23 = arith.constant dense<0.000000e+00> : vector<60x192xf32>
    %36 = tpu.matmul %33, %35, %cst_23 {dimension_numbers = #tpu.dot_dimension_numbers<[1], [0], [0], [1], [0, 0, 1, 1], [], []>} : vector<60x112xbf16>, vector<112x192xbf16>, vector<60x192xf32> -> vector<60x192xf32>
    %37 = arith.addf %31, %36 : vector<60x192xf32>
    %38 = vector.extract_strided_slice %26 {offsets = [2, 0], sizes = [60, 112], strides = [1, 1]} : vector<62x112xf32> to vector<60x112xf32>
    %39 = arith.truncf %38 : vector<60x112xf32> to vector<60x112xbf16>
    %c2_24 = arith.constant 2 : index
    %c0_25 = arith.constant 0 : index
    %c0_26 = arith.constant 0 : index
    %40 = vector.load %arg5[%c2_24, %c0_25, %c0_26] : memref<3x112x192xbf16, #tpu.memory_space<vmem>>, vector<1x112x192xbf16>
    %41 = vector.shape_cast %40 : vector<1x112x192xbf16> to vector<112x192xbf16>
    %cst_27 = arith.constant dense<0.000000e+00> : vector<60x192xf32>
    %42 = tpu.matmul %39, %41, %cst_27 {dimension_numbers = #tpu.dot_dimension_numbers<[1], [0], [0], [1], [0, 0, 1, 1], [], []>} : vector<60x112xbf16>, vector<112x192xbf16>, vector<60x192xf32> -> vector<60x192xf32>
    %43 = arith.addf %37, %42 : vector<60x192xf32>
    %cst_28 = arith.constant 0.000000e+00 : f32
    %44 = vector.broadcast %cst_28 : f32 to vector<60x192xf32>
    %45 = arith.maximumf %43, %44 : vector<60x192xf32>
    %c0_29 = arith.constant 0 : index
    %c0_30 = arith.constant 0 : index
    %46 = vector.load %arg6[%c0_29, %c0_30] : memref<1x192xf32, #tpu.memory_space<vmem>>, vector<1x192xf32>
    %47 = vector.broadcast %46 : vector<1x192xf32> to vector<60x192xf32>
    %48 = arith.mulf %45, %47 : vector<60x192xf32>
    %c0_31 = arith.constant 0 : index
    %c0_32 = arith.constant 0 : index
    %49 = vector.load %arg7[%c0_31, %c0_32] : memref<1x192xf32, #tpu.memory_space<vmem>>, vector<1x192xf32>
    %50 = vector.broadcast %49 : vector<1x192xf32> to vector<60x192xf32>
    %51 = arith.addf %48, %50 : vector<60x192xf32>
    %52 = arith.truncf %51 : vector<60x192xf32> to vector<60x192xbf16>
    %c0_33 = arith.constant 0 : index
    %c0_34 = arith.constant 0 : index
    %53 = vector.load %arg8[%c0_33, %c0_34] : memref<192x120xbf16, #tpu.memory_space<vmem>>, vector<192x120xbf16>
    %cst_35 = arith.constant dense<0.000000e+00> : vector<60x120xf32>
    %54 = tpu.matmul %52, %53, %cst_35 {dimension_numbers = #tpu.dot_dimension_numbers<[1], [0], [0], [1], [0, 0, 1, 1], [], []>} : vector<60x192xbf16>, vector<192x120xbf16>, vector<60x120xf32> -> vector<60x120xf32>
    %55 = arith.truncf %54 : vector<60x120xf32> to vector<60x120xbf16>
    %c0_36 = arith.constant 0 : index
    %c0_37 = arith.constant 0 : index
    %56 = vector.load %arg9[%c0_36, %c0_37] : memref<24x60xbf16, #tpu.memory_space<vmem>>, vector<24x60xbf16>
    %cst_38 = arith.constant dense<0.000000e+00> : vector<24x120xf32>
    %57 = tpu.matmul %56, %55, %cst_38 {dimension_numbers = #tpu.dot_dimension_numbers<[1], [0], [0], [1], [0, 0, 1, 1], [], []>} : vector<24x60xbf16>, vector<60x120xbf16>, vector<24x120xf32> -> vector<24x120xf32>
    %c0_39 = arith.constant 0 : index
    %c0_40 = arith.constant 0 : index
    %58 = vector.load %arg10[%c0_39, %c0_40] : memref<24x60xbf16, #tpu.memory_space<vmem>>, vector<24x60xbf16>
    %cst_41 = arith.constant dense<0.000000e+00> : vector<24x120xf32>
    %59 = tpu.matmul %58, %55, %cst_41 {dimension_numbers = #tpu.dot_dimension_numbers<[1], [0], [0], [1], [0, 0, 1, 1], [], []>} : vector<24x60xbf16>, vector<60x120xbf16>, vector<24x120xf32> -> vector<24x120xf32>
    %60 = arith.maximumf %57, %59 : vector<24x120xf32>
    %61 = arith.truncf %60 : vector<24x120xf32> to vector<24x120xbf16>
    %c0_42 = arith.constant 0 : index
    %c0_43 = arith.constant 0 : index
    %62 = vector.load %arg11[%c0_42, %c0_43] : memref<120x60xbf16, #tpu.memory_space<vmem>>, vector<120x60xbf16>
    %cst_44 = arith.constant dense<0.000000e+00> : vector<24x60xf32>
    %63 = tpu.matmul %61, %62, %cst_44 {dimension_numbers = #tpu.dot_dimension_numbers<[1], [0], [0], [1], [0, 0, 1, 1], [], []>} : vector<24x120xbf16>, vector<120x60xbf16>, vector<24x60xf32> -> vector<24x60xf32>
    %c0_45 = arith.constant 0 : index
    %c0_46 = arith.constant 0 : index
    %64 = vector.load %arg12[%c0_45, %c0_46] : memref<120x60xbf16, #tpu.memory_space<vmem>>, vector<120x60xbf16>
    %cst_47 = arith.constant dense<0.000000e+00> : vector<24x60xf32>
    %65 = tpu.matmul %61, %64, %cst_47 {dimension_numbers = #tpu.dot_dimension_numbers<[1], [0], [0], [1], [0, 0, 1, 1], [], []>} : vector<24x120xbf16>, vector<120x60xbf16>, vector<24x60xf32> -> vector<24x60xf32>
    %66 = arith.maximumf %63, %65 : vector<24x60xf32>
    %67 = vector.extract_strided_slice %66 {offsets = [0, 0], sizes = [22, 60], strides = [1, 1]} : vector<24x60xf32> to vector<22x60xf32>
    %68 = arith.truncf %67 : vector<22x60xf32> to vector<22x60xbf16>
    %c0_48 = arith.constant 0 : index
    %c0_49 = arith.constant 0 : index
    %c0_50 = arith.constant 0 : index
    %69 = vector.load %arg13[%c0_48, %c0_49, %c0_50] : memref<3x60x64xbf16, #tpu.memory_space<vmem>>, vector<1x60x64xbf16>
    %70 = vector.shape_cast %69 : vector<1x60x64xbf16> to vector<60x64xbf16>
    %cst_51 = arith.constant dense<0.000000e+00> : vector<22x64xf32>
    %71 = tpu.matmul %68, %70, %cst_51 {dimension_numbers = #tpu.dot_dimension_numbers<[1], [0], [0], [1], [0, 0, 1, 1], [], []>} : vector<22x60xbf16>, vector<60x64xbf16>, vector<22x64xf32> -> vector<22x64xf32>
    %72 = vector.extract_strided_slice %66 {offsets = [1, 0], sizes = [22, 60], strides = [1, 1]} : vector<24x60xf32> to vector<22x60xf32>
    %73 = arith.truncf %72 : vector<22x60xf32> to vector<22x60xbf16>
    %c1_52 = arith.constant 1 : index
    %c0_53 = arith.constant 0 : index
    %c0_54 = arith.constant 0 : index
    %74 = vector.load %arg13[%c1_52, %c0_53, %c0_54] : memref<3x60x64xbf16, #tpu.memory_space<vmem>>, vector<1x60x64xbf16>
    %75 = vector.shape_cast %74 : vector<1x60x64xbf16> to vector<60x64xbf16>
    %cst_55 = arith.constant dense<0.000000e+00> : vector<22x64xf32>
    %76 = tpu.matmul %73, %75, %cst_55 {dimension_numbers = #tpu.dot_dimension_numbers<[1], [0], [0], [1], [0, 0, 1, 1], [], []>} : vector<22x60xbf16>, vector<60x64xbf16>, vector<22x64xf32> -> vector<22x64xf32>
    %77 = arith.addf %71, %76 : vector<22x64xf32>
    %78 = vector.extract_strided_slice %66 {offsets = [2, 0], sizes = [22, 60], strides = [1, 1]} : vector<24x60xf32> to vector<22x60xf32>
    %79 = arith.truncf %78 : vector<22x60xf32> to vector<22x60xbf16>
    %c2_56 = arith.constant 2 : index
    %c0_57 = arith.constant 0 : index
    %c0_58 = arith.constant 0 : index
    %80 = vector.load %arg13[%c2_56, %c0_57, %c0_58] : memref<3x60x64xbf16, #tpu.memory_space<vmem>>, vector<1x60x64xbf16>
    %81 = vector.shape_cast %80 : vector<1x60x64xbf16> to vector<60x64xbf16>
    %cst_59 = arith.constant dense<0.000000e+00> : vector<22x64xf32>
    %82 = tpu.matmul %79, %81, %cst_59 {dimension_numbers = #tpu.dot_dimension_numbers<[1], [0], [0], [1], [0, 0, 1, 1], [], []>} : vector<22x60xbf16>, vector<60x64xbf16>, vector<22x64xf32> -> vector<22x64xf32>
    %83 = arith.addf %77, %82 : vector<22x64xf32>
    %cst_60 = arith.constant 0.000000e+00 : f32
    %84 = vector.broadcast %cst_60 : f32 to vector<22x64xf32>
    %85 = arith.maximumf %83, %84 : vector<22x64xf32>
    %c0_61 = arith.constant 0 : index
    %c0_62 = arith.constant 0 : index
    %86 = vector.load %arg14[%c0_61, %c0_62] : memref<1x64xf32, #tpu.memory_space<vmem>>, vector<1x64xf32>
    %87 = vector.broadcast %86 : vector<1x64xf32> to vector<22x64xf32>
    %88 = arith.mulf %85, %87 : vector<22x64xf32>
    %c0_63 = arith.constant 0 : index
    %c0_64 = arith.constant 0 : index
    %89 = vector.load %arg15[%c0_63, %c0_64] : memref<1x64xf32, #tpu.memory_space<vmem>>, vector<1x64xf32>
    %90 = vector.broadcast %89 : vector<1x64xf32> to vector<22x64xf32>
    %91 = arith.addf %88, %90 : vector<22x64xf32>
    %92 = vector.extract_strided_slice %91 {offsets = [0, 0], sizes = [20, 64], strides = [1, 1]} : vector<22x64xf32> to vector<20x64xf32>
    %93 = arith.truncf %92 : vector<20x64xf32> to vector<20x64xbf16>
    %c0_65 = arith.constant 0 : index
    %c0_66 = arith.constant 0 : index
    %c0_67 = arith.constant 0 : index
    %94 = vector.load %arg16[%c0_65, %c0_66, %c0_67] : memref<3x64x32xbf16, #tpu.memory_space<vmem>>, vector<1x64x32xbf16>
    %95 = vector.shape_cast %94 : vector<1x64x32xbf16> to vector<64x32xbf16>
    %cst_68 = arith.constant dense<0.000000e+00> : vector<20x32xf32>
    %96 = tpu.matmul %93, %95, %cst_68 {dimension_numbers = #tpu.dot_dimension_numbers<[1], [0], [0], [1], [0, 0, 1, 1], [], []>} : vector<20x64xbf16>, vector<64x32xbf16>, vector<20x32xf32> -> vector<20x32xf32>
    %97 = vector.extract_strided_slice %91 {offsets = [1, 0], sizes = [20, 64], strides = [1, 1]} : vector<22x64xf32> to vector<20x64xf32>
    %98 = arith.truncf %97 : vector<20x64xf32> to vector<20x64xbf16>
    %c1_69 = arith.constant 1 : index
    %c0_70 = arith.constant 0 : index
    %c0_71 = arith.constant 0 : index
    %99 = vector.load %arg16[%c1_69, %c0_70, %c0_71] : memref<3x64x32xbf16, #tpu.memory_space<vmem>>, vector<1x64x32xbf16>
    %100 = vector.shape_cast %99 : vector<1x64x32xbf16> to vector<64x32xbf16>
    %cst_72 = arith.constant dense<0.000000e+00> : vector<20x32xf32>
    %101 = tpu.matmul %98, %100, %cst_72 {dimension_numbers = #tpu.dot_dimension_numbers<[1], [0], [0], [1], [0, 0, 1, 1], [], []>} : vector<20x64xbf16>, vector<64x32xbf16>, vector<20x32xf32> -> vector<20x32xf32>
    %102 = arith.addf %96, %101 : vector<20x32xf32>
    %103 = vector.extract_strided_slice %91 {offsets = [2, 0], sizes = [20, 64], strides = [1, 1]} : vector<22x64xf32> to vector<20x64xf32>
    %104 = arith.truncf %103 : vector<20x64xf32> to vector<20x64xbf16>
    %c2_73 = arith.constant 2 : index
    %c0_74 = arith.constant 0 : index
    %c0_75 = arith.constant 0 : index
    %105 = vector.load %arg16[%c2_73, %c0_74, %c0_75] : memref<3x64x32xbf16, #tpu.memory_space<vmem>>, vector<1x64x32xbf16>
    %106 = vector.shape_cast %105 : vector<1x64x32xbf16> to vector<64x32xbf16>
    %cst_76 = arith.constant dense<0.000000e+00> : vector<20x32xf32>
    %107 = tpu.matmul %104, %106, %cst_76 {dimension_numbers = #tpu.dot_dimension_numbers<[1], [0], [0], [1], [0, 0, 1, 1], [], []>} : vector<20x64xbf16>, vector<64x32xbf16>, vector<20x32xf32> -> vector<20x32xf32>
    %108 = arith.addf %102, %107 : vector<20x32xf32>
    %cst_77 = arith.constant 0.000000e+00 : f32
    %109 = vector.broadcast %cst_77 : f32 to vector<20x32xf32>
    %110 = arith.maximumf %108, %109 : vector<20x32xf32>
    %c0_78 = arith.constant 0 : index
    %c0_79 = arith.constant 0 : index
    %111 = vector.load %arg17[%c0_78, %c0_79] : memref<1x32xf32, #tpu.memory_space<vmem>>, vector<1x32xf32>
    %112 = vector.broadcast %111 : vector<1x32xf32> to vector<20x32xf32>
    %113 = arith.mulf %110, %112 : vector<20x32xf32>
    %c0_80 = arith.constant 0 : index
    %c0_81 = arith.constant 0 : index
    %114 = vector.load %arg18[%c0_80, %c0_81] : memref<1x32xf32, #tpu.memory_space<vmem>>, vector<1x32xf32>
    %115 = vector.broadcast %114 : vector<1x32xf32> to vector<20x32xf32>
    %116 = arith.addf %113, %115 : vector<20x32xf32>
    %c0_82 = arith.constant 0 : index
    %c0_83 = arith.constant 0 : index
    %117 = vector.load %arg19[%c0_82, %c0_83] : memref<4x20xbf16, #tpu.memory_space<vmem>>, vector<4x20xbf16>
    %118 = arith.truncf %116 : vector<20x32xf32> to vector<20x32xbf16>
    %cst_84 = arith.constant dense<0.000000e+00> : vector<4x32xf32>
    %119 = tpu.matmul %117, %118, %cst_84 {dimension_numbers = #tpu.dot_dimension_numbers<[1], [0], [0], [1], [0, 0, 1, 1], [], []>} : vector<4x20xbf16>, vector<20x32xbf16>, vector<4x32xf32> -> vector<4x32xf32>
    %120 = arith.truncf %119 : vector<4x32xf32> to vector<4x32xbf16>
    %c0_85 = arith.constant 0 : index
    %c0_86 = arith.constant 0 : index
    %121 = vector.load %arg20[%c0_85, %c0_86] : memref<32x128xbf16, #tpu.memory_space<vmem>>, vector<32x128xbf16>
    %cst_87 = arith.constant dense<0.000000e+00> : vector<4x128xf32>
    %122 = tpu.matmul %120, %121, %cst_87 {dimension_numbers = #tpu.dot_dimension_numbers<[1], [0], [0], [1], [0, 0, 1, 1], [], []>} : vector<4x32xbf16>, vector<32x128xbf16>, vector<4x128xf32> -> vector<4x128xf32>
    %123 = tpu.iota {dimensions = array<i32: 1>} : vector<4x128xi32>
    %c10_i32 = arith.constant 10 : i32
    %124 = vector.broadcast %c10_i32 : i32 to vector<4x128xi32>
    %125 = arith.cmpi slt, %123, %124 : vector<4x128xi32>
    %cst_88 = arith.constant -1.000000e+30 : f32
    %126 = vector.broadcast %cst_88 : f32 to vector<4x128xf32>
    %127 = arith.select %125, %122, %126 : vector<4x128xi1>, vector<4x128xf32>
    %cst_89 = arith.constant dense<0xFF800000> : vector<4xf32>
    %128 = vector.multi_reduction <maximumf>, %127, %cst_89 [1] : vector<4x128xf32> to vector<4xf32>
    %129 = vector.shape_cast %128 : vector<4xf32> to vector<4x1xf32>
    %130 = vector.broadcast %129 : vector<4x1xf32> to vector<4x128xf32>
    %131 = arith.subf %127, %130 : vector<4x128xf32>
    %132 = math.exp %131 : vector<4x128xf32>
    %cst_90 = arith.constant 0.000000e+00 : f32
    %133 = vector.broadcast %cst_90 : f32 to vector<4x128xf32>
    %134 = arith.select %125, %132, %133 : vector<4x128xi1>, vector<4x128xf32>
    %cst_91 = arith.constant dense<0.000000e+00> : vector<4xf32>
    %135 = vector.multi_reduction <add>, %134, %cst_91 [1] : vector<4x128xf32> to vector<4xf32>
    %136 = vector.shape_cast %135 : vector<4xf32> to vector<4x1xf32>
    %137 = math.log %136 : vector<4x1xf32>
    %138 = vector.broadcast %137 : vector<4x1xf32> to vector<4x128xf32>
    %139 = arith.subf %131, %138 : vector<4x128xf32>
    %cst_92 = arith.constant 0.000000e+00 : f32
    %140 = vector.broadcast %cst_92 : f32 to vector<4x128xf32>
    %141 = arith.select %125, %139, %140 : vector<4x128xi1>, vector<4x128xf32>
    %c0_93 = arith.constant 0 : index
    %c0_94 = arith.constant 0 : index
    %c0_95 = arith.constant 0 : index
    %142 = vector.load %arg21[%c0_93, %c0_94, %c0_95] : memref<1x4x128xf32, #tpu.memory_space<vmem>>, vector<1x4x128xf32>
    %143 = vector.shape_cast %142 : vector<1x4x128xf32> to vector<4x128xf32>
    %144 = vector.shape_cast %141 : vector<4x128xf32> to vector<1x4x128xf32>
    tpu.vector_store %arg21[%c0_93, %c0_94, %c0_95], %144 {strides = array<i32>} : memref<1x4x128xf32, #tpu.memory_space<vmem>>, vector<1x4x128xf32>,
    return
  }
  func.func @transform_0(%arg0: i32) -> (i32, i32, i32) {
    %c0_i32 = arith.constant 0 : i32
    %c0_i32_0 = arith.constant 0 : i32
    %c0_i32_1 = arith.constant 0 : i32
    return %arg0, %c0_i32, %c0_i32_0 : i32, i32, i32
  }
  func.func @transform_1(%arg0: i32) -> (i32, i32, i32) {
    %c0_i32 = arith.constant 0 : i32
    %c0_i32_0 = arith.constant 0 : i32
    %c0_i32_1 = arith.constant 0 : i32
    %c0_i32_2 = arith.constant 0 : i32
    return %c0_i32, %c0_i32_0, %c0_i32_1 : i32, i32, i32
  }
  func.func @transform_2(%arg0: i32) -> (i32, i32) {
    %c0_i32 = arith.constant 0 : i32
    %c0_i32_0 = arith.constant 0 : i32
    %c0_i32_1 = arith.constant 0 : i32
    return %c0_i32, %c0_i32_0 : i32, i32
  }
  func.func @transform_3(%arg0: i32) -> (i32, i32) {
    %c0_i32 = arith.constant 0 : i32
    %c0_i32_0 = arith.constant 0 : i32
    %c0_i32_1 = arith.constant 0 : i32
    return %c0_i32, %c0_i32_0 : i32, i32
  }
  func.func @transform_4(%arg0: i32) -> (i32, i32, i32) {
    %c0_i32 = arith.constant 0 : i32
    %c0_i32_0 = arith.constant 0 : i32
    %c0_i32_1 = arith.constant 0 : i32
    %c0_i32_2 = arith.constant 0 : i32
    return %c0_i32, %c0_i32_0, %c0_i32_1 : i32, i32, i32
  }
  func.func @transform_5(%arg0: i32) -> (i32, i32) {
    %c0_i32 = arith.constant 0 : i32
    %c0_i32_0 = arith.constant 0 : i32
    %c0_i32_1 = arith.constant 0 : i32
    return %c0_i32, %c0_i32_0 : i32, i32
  }
  func.func @transform_6(%arg0: i32) -> (i32, i32) {
    %c0_i32 = arith.constant 0 : i32
    %c0_i32_0 = arith.constant 0 : i32
    %c0_i32_1 = arith.constant 0 : i32
    return %c0_i32, %c0_i32_0 : i32, i32
  }
  func.func @transform_7(%arg0: i32) -> (i32, i32) {
    %c0_i32 = arith.constant 0 : i32
    %c0_i32_0 = arith.constant 0 : i32
    %c0_i32_1 = arith.constant 0 : i32
    return %c0_i32, %c0_i32_0 : i32, i32
  }
  func.func @transform_8(%arg0: i32) -> (i32, i32) {
    %c0_i32 = arith.constant 0 : i32
    %c0_i32_0 = arith.constant 0 : i32
    %c0_i32_1 = arith.constant 0 : i32
    return %c0_i32, %c0_i32_0 : i32, i32
  }
  func.func @transform_9(%arg0: i32) -> (i32, i32) {
    %c0_i32 = arith.constant 0 : i32
    %c0_i32_0 = arith.constant 0 : i32
    %c0_i32_1 = arith.constant 0 : i32
    return %c0_i32, %c0_i32_0 : i32, i32
  }
  func.func @transform_10(%arg0: i32) -> (i32, i32) {
    %c0_i32 = arith.constant 0 : i32
    %c0_i32_0 = arith.constant 0 : i32
    %c0_i32_1 = arith.constant 0 : i32
    return %c0_i32, %c0_i32_0 : i32, i32
  }
  func.func @transform_11(%arg0: i32) -> (i32, i32) {
    %c0_i32 = arith.constant 0 : i32
    %c0_i32_0 = arith.constant 0 : i32
    %c0_i32_1 = arith.constant 0 : i32
    return %c0_i32, %c0_i32_0 : i32, i32
  }
  func.func @transform_12(%arg0: i32) -> (i32, i32, i32) {
    %c0_i32 = arith.constant 0 : i32
    %c0_i32_0 = arith.constant 0 : i32
    %c0_i32_1 = arith.constant 0 : i32
    %c0_i32_2 = arith.constant 0 : i32
    return %c0_i32, %c0_i32_0, %c0_i32_1 : i32, i32, i32
  }
  func.func @transform_13(%arg0: i32) -> (i32, i32) {
    %c0_i32 = arith.constant 0 : i32
    %c0_i32_0 = arith.constant 0 : i32
    %c0_i32_1 = arith.constant 0 : i32
    return %c0_i32, %c0_i32_0 : i32, i32
  }
  func.func @transform_14(%arg0: i32) -> (i32, i32) {
    %c0_i32 = arith.constant 0 : i32
    %c0_i32_0 = arith.constant 0 : i32
    %c0_i32_1 = arith.constant 0 : i32
    return %c0_i32, %c0_i32_0 : i32, i32
  }
  func.func @transform_15(%arg0: i32) -> (i32, i32, i32) {
    %c0_i32 = arith.constant 0 : i32
    %c0_i32_0 = arith.constant 0 : i32
    %c0_i32_1 = arith.constant 0 : i32
    %c0_i32_2 = arith.constant 0 : i32
    return %c0_i32, %c0_i32_0, %c0_i32_1 : i32, i32, i32
  }
  func.func @transform_16(%arg0: i32) -> (i32, i32) {
    %c0_i32 = arith.constant 0 : i32
    %c0_i32_0 = arith.constant 0 : i32
    %c0_i32_1 = arith.constant 0 : i32
    return %c0_i32, %c0_i32_0 : i32, i32
  }
  func.func @transform_17(%arg0: i32) -> (i32, i32) {
    %c0_i32 = arith.constant 0 : i32
    %c0_i32_0 = arith.constant 0 : i32
    %c0_i32_1 = arith.constant 0 : i32
    return %c0_i32, %c0_i32_0 : i32, i32
  }
  func.func @transform_18(%arg0: i32) -> (i32, i32) {
    %c0_i32 = arith.constant 0 : i32
    %c0_i32_0 = arith.constant 0 : i32
    %c0_i32_1 = arith.constant 0 : i32
    return %c0_i32, %c0_i32_0 : i32, i32
  }
  func.func @transform_19(%arg0: i32) -> (i32, i32) {
    %c0_i32 = arith.constant 0 : i32
    %c0_i32_0 = arith.constant 0 : i32
    %c0_i32_1 = arith.constant 0 : i32
    return %c0_i32, %c0_i32_0 : i32, i32
  }
  func.func @transform_20(%arg0: i32) -> (i32, i32, i32) {
    %c0_i32 = arith.constant 0 : i32
    %c0_i32_0 = arith.constant 0 : i32
    %c0_i32_1 = arith.constant 0 : i32
    return %arg0, %c0_i32, %c0_i32_0 : i32, i32, i32
  }
}

</mosaic_0001>

<llo_original>
// kernel: net_forward.1
$region0: #{net_forward.1}
  #allocation0 [shape = 'u32[]', space=smem, size = 0x4, offset = 0x4, fixed_abs, tag = 'smem constant byte address 0x4 - core index']
  #allocation1 [shape = 'u32[72,128]{1,0:T(1,128)}', space=vmem, size = 0x9000, scoped, tag = 'internal scratch']
  %s0 = inlined_call_operand.vmem [shape: f32[2,64,16], index: 0, kind: input, shape index: {}]
  %s1 = inlined_call_operand.vmem [shape: bf16[3,16,112], index: 1, kind: input, shape index: {}]
  %s2 = inlined_call_operand.vmem [shape: f32[1,112], index: 2, kind: input, shape index: {}]
  %s3 = inlined_call_operand.vmem [shape: f32[1,112], index: 3, kind: input, shape index: {}]
  %s4 = inlined_call_operand.vmem [shape: bf16[3,112,192], index: 4, kind: input, shape index: {}]
  %s5 = inlined_call_operand.vmem [shape: f32[1,192], index: 5, kind: input, shape index: {}]
  %s6 = inlined_call_operand.vmem [shape: f32[1,192], index: 6, kind: input, shape index: {}]
  %s7 = inlined_call_operand.vmem [shape: bf16[192,120], index: 7, kind: input, shape index: {}]
  %s8 = inlined_call_operand.vmem [shape: bf16[24,60], index: 8, kind: input, shape index: {}]
  %s9 = inlined_call_operand.vmem [shape: bf16[24,60], index: 9, kind: input, shape index: {}]
  %s10 = inlined_call_operand.vmem [shape: bf16[120,60], index: 10, kind: input, shape index: {}]
  %s11 = inlined_call_operand.vmem [shape: bf16[120,60], index: 11, kind: input, shape index: {}]
  %s12 = inlined_call_operand.vmem [shape: bf16[3,60,64], index: 12, kind: input, shape index: {}]
  %s13 = inlined_call_operand.vmem [shape: f32[1,64], index: 13, kind: input, shape index: {}]
  %s14 = inlined_call_operand.vmem [shape: f32[1,64], index: 14, kind: input, shape index: {}]
  %s15 = inlined_call_operand.vmem [shape: bf16[3,64,32], index: 15, kind: input, shape index: {}]
  %s16 = inlined_call_operand.vmem [shape: f32[1,32], index: 16, kind: input, shape index: {}]
  %s17 = inlined_call_operand.vmem [shape: f32[1,32], index: 17, kind: input, shape index: {}]
  %s18 = inlined_call_operand.vmem [shape: bf16[4,20], index: 18, kind: input, shape index: {}]
  %s19 = inlined_call_operand.vmem [shape: bf16[32,128], index: 19, kind: input, shape index: {}]
  %s20 = inlined_call_operand.hbm [shape: f32[2,4,128], index: 20, kind: output, shape index: {}]
  %s21 = sld [smem:[#allocation0]]
  $region113: #{net_forward.1} parent=0
    _
  %s23 = ssub.s32 1, %s21
  %s24 = scalar_select 0, %s23, %s21
  $region1: #{net_forward.1} parent=0
    #allocation2 [shape = 'u8[4096]{0}', space=vmem, size = 0x1000, scoped, tag = 'output window, operand 0']
    #allocation3 [shape = 's32[2]{0}', space=sflag, size = 0x8, scoped, tag = 'scoped memory for net_forward.1']
    %25 = vsyncpa [#allocation3], 0
    %s26 = scalar_lea.sflag [#allocation3], 1
    %27 = vsyncpa %s26, 0
    loop: start=0, step=1, limit=4
    $region2: #{net_forward.1} parent=1 // loop_pre_header
      _
    $region3: #{net_forward.1} parent=1 // loop_header
      %s29 = sphi 0, %s33
      %p30 = scmp.ge.s32.totalorder %s29, 4
      %s39 = sphi 0, %s41
      %s42 = sphi 0, %s39
      %s43 = sphi 0, %s42
      %s59 = sphi 0, %s43
      %s63 = sphi 0, %s63
      %s65 = sphi 0, %s63
      %s66 = sphi 0, %s65
      %s80 = sphi 0, %s66
      %s84 = sphi 0, %s84
      %s86 = sphi 0, %s84
      %s87 = sphi 0, %s86
      %s101 = sphi 0, %s87
      %s105 = sphi 0, %s105
      %s107 = sphi 0, %s105
      %s108 = sphi 0, %s107
      %s122 = sphi 0, %s108
      %s126 = sphi 0, %s126
      %s128 = sphi 0, %s126
      %s129 = sphi 0, %s128
      %s143 = sphi 0, %s129
      %s147 = sphi 0, %s147
      %s149 = sphi 0, %s147
      %s150 = sphi 0, %s149
      %s164 = sphi 0, %s150
      %s168 = sphi 0, %s168
      %s170 = sphi 0, %s168
      %s171 = sphi 0, %s170
      %s185 = sphi 0, %s171
      %s189 = sphi 0, %s189
      %s191 = sphi 0, %s189
      %s192 = sphi 0, %s191
      %s206 = sphi 0, %s192
      %s210 = sphi 0, %s210
      %s212 = sphi 0, %s210
      %s213 = sphi 0, %s212
      %s227 = sphi 0, %s213
      %s231 = sphi 0, %s231
      %s233 = sphi 0, %s231
      %s234 = sphi 0, %s233
      %s248 = sphi 0, %s234
      %s252 = sphi 0, %s252
      %s254 = sphi 0, %s252
      %s255 = sphi 0, %s254
      %s269 = sphi 0, %s255
      %s273 = sphi 0, %s273
      %s275 = sphi 0, %s273
      %s276 = sphi 0, %s275
      %s290 = sphi 0, %s276
      %s294 = sphi 0, %s294
      %s296 = sphi 0, %s294
      %s297 = sphi 0, %s296
      %s311 = sphi 0, %s297
      %s315 = sphi 0, %s315
      %s317 = sphi 0, %s315
      %s318 = sphi 0, %s317
      %s332 = sphi 0, %s318
      %s336 = sphi 0, %s336
      %s338 = sphi 0, %s336
      %s339 = sphi 0, %s338
      %s353 = sphi 0, %s339
      %s357 = sphi 0, %s357
      %s359 = sphi 0, %s357
      %s360 = sphi 0, %s359
      %s374 = sphi 0, %s360
      %s378 = sphi 0, %s378
      %s380 = sphi 0, %s378
      %s381 = sphi 0, %s380
      %s395 = sphi 0, %s381
      %s399 = sphi 0, %s399
      %s401 = sphi 0, %s399
      %s402 = sphi 0, %s401
      %s416 = sphi 0, %s402
      %s420 = sphi 0, %s420
      %s422 = sphi 0, %s420
      %s423 = sphi 0, %s422
      %s437 = sphi 0, %s423
      %s441 = sphi 0, %s441
      %s443 = sphi 0, %s441
      %s444 = sphi 0, %s443
      %s458 = sphi 0, %s444
      %s464 = sphi 0, %s466
      %s467 = sphi 0, %s464
      %s468 = sphi 0, %s467
      %s484 = sphi 0, %s468
    $region4: #{net_forward.1} parent=1 // loop_header_branch
      %32 = sbr.rel (%p30) target = $region8
    $region5: #{net_forward.1} parent=1 // loop_body
      %s34 = ssub.s32 %s29, 1
      %s35 = ssub.s32 %s29, 2
      %s36 = sadd.s32 %s29, 1
      %s37 = ssub.s32 %s29, %s36
      %p38 = scmp.eq.s32.totalorder %s37, 0
      %s40 = sadd.s32 %s39, 1
      %s41 = scalar_select %p38, %s39, %s40
      %p44 = pneg %p38
      %p45 = scmp.eq.s32.totalorder %s29, 1
      %p46 = por %p44, %p45
      %p47 = scmp.ne.s32.totalorder %s39, %s42
      %p48 = scmp.eq.s32.totalorder %s29, 0
      %p49 = por %p47, %p48
      %p50 = scmp.ne.s32.totalorder %s39, %s42
      %p51 = scmp.eq.s32.totalorder %s34, 1
      %p52 = por %p50, %p51
      %p53 = scmp.ne.s32.totalorder %s42, %s43
      %p54 = scmp.eq.s32.totalorder %s34, 0
      %p55 = por %p53, %p54
      %p56 = scmp.ne.s32.totalorder %s42, %s43
      %p57 = scmp.eq.s32.totalorder %s35, 1
      %p58 = por %p56, %p57
      %p60 = scmp.ne.s32.totalorder %s43, %s59
      %p61 = scmp.eq.s32.totalorder %s35, 0
      %p62 = por %p60, %p61
      %s64 = sadd.s32 %s63, 1
      %p67 = scmp.eq.s32.totalorder %s29, 1
      %p68 = scmp.ne.s32.totalorder %s63, %s65
      %p69 = scmp.eq.s32.totalorder %s29, 0
      %p70 = por %p68, %p69
      %p71 = scmp.ne.s32.totalorder %s63, %s65
      %p72 = scmp.eq.s32.totalorder %s34, 1
      %p73 = por %p71, %p72
      %p74 = scmp.ne.s32.totalorder %s65, %s66
      %p75 = scmp.eq.s32.totalorder %s34, 0
      %p76 = por %p74, %p75
      %p77 = scmp.ne.s32.totalorder %s65, %s66
      %p78 = scmp.eq.s32.totalorder %s35, 1
      %p79 = por %p77, %p78
      %p81 = scmp.ne.s32.totalorder %s66, %s80
      %p82 = scmp.eq.s32.totalorder %s35, 0
      %p83 = por %p81, %p82
      %s85 = sadd.s32 %s84, 1
      %p88 = scmp.eq.s32.totalorder %s29, 1
      %p89 = scmp.ne.s32.totalorder %s84, %s86
      %p90 = scmp.eq.s32.totalorder %s29, 0
      %p91 = por %p89, %p90
      %p92 = scmp.ne.s32.totalorder %s84, %s86
      %p93 = scmp.eq.s32.totalorder %s34, 1
      %p94 = por %p92, %p93
      %p95 = scmp.ne.s32.totalorder %s86, %s87
      %p96 = scmp.eq.s32.totalorder %s34, 0
      %p97 = por %p95, %p96
      %p98 = scmp.ne.s32.totalorder %s86, %s87
      %p99 = scmp.eq.s32.totalorder %s35, 1
      %p100 = por %p98, %p99
      %p102 = scmp.ne.s32.totalorder %s87, %s101
      %p103 = scmp.eq.s32.totalorder %s35, 0
      %p104 = por %p102, %p103
      %s106 = sadd.s32 %s105, 1
      %p109 = scmp.eq.s32.totalorder %s29, 1
      %p110 = scmp.ne.s32.totalorder %s105, %s107
      %p111 = scmp.eq.s32.totalorder %s29, 0
      %p112 = por %p110, %p111
      %p113 = scmp.ne.s32.totalorder %s105, %s107
      %p114 = scmp.eq.s32.totalorder %s34, 1
      %p115 = por %p113, %p114
      %p116 = scmp.ne.s32.totalorder %s107, %s108
      %p117 = scmp.eq.s32.totalorder %s34, 0
      %p118 = por %p116, %p117
      %p119 = scmp.ne.s32.totalorder %s107, %s108
      %p120 = scmp.eq.s32.totalorder %s35, 1
      %p121 = por %p119, %p120
      %p123 = scmp.ne.s32.totalorder %s108, %s122
      %p124 = scmp.eq.s32.totalorder %s35, 0
      %p125 = por %p123, %p124
      %s127 = sadd.s32 %s126, 1
      %p130 = scmp.eq.s32.totalorder %s29, 1
      %p131 = scmp.ne.s32.totalorder %s126, %s128
      %p132 = scmp.eq.s32.totalorder %s29, 0
      %p133 = por %p131, %p132
      %p134 = scmp.ne.s32.totalorder %s126, %s128
      %p135 = scmp.eq.s32.totalorder %s34, 1
      %p136 = por %p134, %p135
      %p137 = scmp.ne.s32.totalorder %s128, %s129
      %p138 = scmp.eq.s32.totalorder %s34, 0
      %p139 = por %p137, %p138
      %p140 = scmp.ne.s32.totalorder %s128, %s129
      %p141 = scmp.eq.s32.totalorder %s35, 1
      %p142 = por %p140, %p141
      %p144 = scmp.ne.s32.totalorder %s129, %s143
      %p145 = scmp.eq.s32.totalorder %s35, 0
      %p146 = por %p144, %p145
      %s148 = sadd.s32 %s147, 1
      %p151 = scmp.eq.s32.totalorder %s29, 1
      %p152 = scmp.ne.s32.totalorder %s147, %s149
      %p153 = scmp.eq.s32.totalorder %s29, 0
      %p154 = por %p152, %p153
      %p155 = scmp.ne.s32.totalorder %s147, %s149
      %p156 = scmp.eq.s32.totalorder %s34, 1
      %p157 = por %p155, %p156
      %p158 = scmp.ne.s32.totalorder %s149, %s150
      %p159 = scmp.eq.s32.totalorder %s34, 0
      %p160 = por %p158, %p159
      %p161 = scmp.ne.s32.totalorder %s149, %s150
      %p162 = scmp.eq.s32.totalorder %s35, 1
      %p163 = por %p161, %p162
      %p165 = scmp.ne.s32.totalorder %s150, %s164
      %p166 = scmp.eq.s32.totalorder %s35, 0
      %p167 = por %p165, %p166
      %s169 = sadd.s32 %s168, 1
      %p172 = scmp.eq.s32.totalorder %s29, 1
      %p173 = scmp.ne.s32.totalorder %s168, %s170
      %p174 = scmp.eq.s32.totalorder %s29, 0
      %p175 = por %p173, %p174
      %p176 = scmp.ne.s32.totalorder %s168, %s170
      %p177 = scmp.eq.s32.totalorder %s34, 1
      %p178 = por %p176, %p177
      %p179 = scmp.ne.s32.totalorder %s170, %s171
      %p180 = scmp.eq.s32.totalorder %s34, 0
      %p181 = por %p179, %p180
      %p182 = scmp.ne.s32.totalorder %s170, %s171
      %p183 = scmp.eq.s32.totalorder %s35, 1
      %p184 = por %p182, %p183
      %p186 = scmp.ne.s32.totalorder %s171, %s185
      %p187 = scmp.eq.s32.totalorder %s35, 0
      %p188 = por %p186, %p187
      %s190 = sadd.s32 %s189, 1
      %p193 = scmp.eq.s32.totalorder %s29, 1
      %p194 = scmp.ne.s32.totalorder %s189, %s191
      %p195 = scmp.eq.s32.totalorder %s29, 0
      %p196 = por %p194, %p195
      %p197 = scmp.ne.s32.totalorder %s189, %s191
      %p198 = scmp.eq.s32.totalorder %s34, 1
      %p199 = por %p197, %p198
      %p200 = scmp.ne.s32.totalorder %s191, %s192
      %p201 = scmp.eq.s32.totalorder %s34, 0
      %p202 = por %p200, %p201
      %p203 = scmp.ne.s32.totalorder %s191, %s192
      %p204 = scmp.eq.s32.totalorder %s35, 1
      %p205 = por %p203, %p204
      %p207 = scmp.ne.s32.totalorder %s192, %s206
      %p208 = scmp.eq.s32.totalorder %s35, 0
      %p209 = por %p207, %p208
      %s211 = sadd.s32 %s210, 1
      %p214 = scmp.eq.s32.totalorder %s29, 1
      %p215 = scmp.ne.s32.totalorder %s210, %s212
      %p216 = scmp.eq.s32.totalorder %s29, 0
      %p217 = por %p215, %p216
      %p218 = scmp.ne.s32.totalorder %s210, %s212
      %p219 = scmp.eq.s32.totalorder %s34, 1
      %p220 = por %p218, %p219
      %p221 = scmp.ne.s32.totalorder %s212, %s213
      %p222 = scmp.eq.s32.totalorder %s34, 0
      %p223 = por %p221, %p222
      %p224 = scmp.ne.s32.totalorder %s212, %s213
      %p225 = scmp.eq.s32.totalorder %s35, 1
      %p226 = por %p224, %p225
      %p228 = scmp.ne.s32.totalorder %s213, %s227
      %p229 = scmp.eq.s32.totalorder %s35, 0
      %p230 = por %p228, %p229
      %s232 = sadd.s32 %s231, 1
      %p235 = scmp.eq.s32.totalorder %s29, 1
      %p236 = scmp.ne.s32.totalorder %s231, %s233
      %p237 = scmp.eq.s32.totalorder %s29, 0
      %p238 = por %p236, %p237
      %p239 = scmp.ne.s32.totalorder %s231, %s233
      %p240 = scmp.eq.s32.totalorder %s34, 1
      %p241 = por %p239, %p240
      %p242 = scmp.ne.s32.totalorder %s233, %s234
      %p243 = scmp.eq.s32.totalorder %s34, 0
      %p244 = por %p242, %p243
      %p245 = scmp.ne.s32.totalorder %s233, %s234
      %p246 = scmp.eq.s32.totalorder %s35, 1
      %p247 = por %p245, %p246
      %p249 = scmp.ne.s32.totalorder %s234, %s248
      %p250 = scmp.eq.s32.totalorder %s35, 0
      %p251 = por %p249, %p250
      %s253 = sadd.s32 %s252, 1
      %p256 = scmp.eq.s32.totalorder %s29, 1
      %p257 = scmp.ne.s32.totalorder %s252, %s254
      %p258 = scmp.eq.s32.totalorder %s29, 0
      %p259 = por %p257, %p258
      %p260 = scmp.ne.s32.totalorder %s252, %s254
      %p261 = scmp.eq.s32.totalorder %s34, 1
      %p262 = por %p260, %p261
      %p263 = scmp.ne.s32.totalorder %s254, %s255
      %p264 = scmp.eq.s32.totalorder %s34, 0
      %p265 = por %p263, %p264
      %p266 = scmp.ne.s32.totalorder %s254, %s255
      %p267 = scmp.eq.s32.totalorder %s35, 1
      %p268 = por %p266, %p267
      %p270 = scmp.ne.s32.totalorder %s255, %s269
      %p271 = scmp.eq.s32.totalorder %s35, 0
      %p272 = por %p270, %p271
      %s274 = sadd.s32 %s273, 1
      %p277 = scmp.eq.s32.totalorder %s29, 1
      %p278 = scmp.ne.s32.totalorder %s273, %s275
      %p279 = scmp.eq.s32.totalorder %s29, 0
      %p280 = por %p278, %p279
      %p281 = scmp.ne.s32.totalorder %s273, %s275
      %p282 = scmp.eq.s32.totalorder %s34, 1
      %p283 = por %p281, %p282
      %p284 = scmp.ne.s32.totalorder %s275, %s276
      %p285 = scmp.eq.s32.totalorder %s34, 0
      %p286 = por %p284, %p285
      %p287 = scmp.ne.s32.totalorder %s275, %s276
      %p288 = scmp.eq.s32.totalorder %s35, 1
      %p289 = por %p287, %p288
      %p291 = scmp.ne.s32.totalorder %s276, %s290
      %p292 = scmp.eq.s32.totalorder %s35, 0
      %p293 = por %p291, %p292
      %s295 = sadd.s32 %s294, 1
      %p298 = scmp.eq.s32.totalorder %s29, 1
      %p299 = scmp.ne.s32.totalorder %s294, %s296
      %p300 = scmp.eq.s32.totalorder %s29, 0
      %p301 = por %p299, %p300
      %p302 = scmp.ne.s32.totalorder %s294, %s296
      %p303 = scmp.eq.s32.totalorder %s34, 1
      %p304 = por %p302, %p303
      %p305 = scmp.ne.s32.totalorder %s296, %s297
      %p306 = scmp.eq.s32.totalorder %s34, 0
      %p307 = por %p305, %p306
      %p308 = scmp.ne.s32.totalorder %s296, %s297
      %p309 = scmp.eq.s32.totalorder %s35, 1
      %p310 = por %p308, %p309
      %p312 = scmp.ne.s32.totalorder %s297, %s311
      %p313 = scmp.eq.s32.totalorder %s35, 0
      %p314 = por %p312, %p313
      %s316 = sadd.s32 %s315, 1
      %p319 = scmp.eq.s32.totalorder %s29, 1
      %p320 = scmp.ne.s32.totalorder %s315, %s317
      %p321 = scmp.eq.s32.totalorder %s29, 0
      %p322 = por %p320, %p321
      %p323 = scmp.ne.s32.totalorder %s315, %s317
      %p324 = scmp.eq.s32.totalorder %s34, 1
      %p325 = por %p323, %p324
      %p326 = scmp.ne.s32.totalorder %s317, %s318
      %p327 = scmp.eq.s32.totalorder %s34, 0
      %p328 = por %p326, %p327
      %p329 = scmp.ne.s32.totalorder %s317, %s318
      %p330 = scmp.eq.s32.totalorder %s35, 1
      %p331 = por %p329, %p330
      %p333 = scmp.ne.s32.totalorder %s318, %s332
      %p334 = scmp.eq.s32.totalorder %s35, 0
      %p335 = por %p333, %p334
      %s337 = sadd.s32 %s336, 1
      %p340 = scmp.eq.s32.totalorder %s29, 1
      %p341 = scmp.ne.s32.totalorder %s336, %s338
      %p342 = scmp.eq.s32.totalorder %s29, 0
      %p343 = por %p341, %p342
      %p344 = scmp.ne.s32.totalorder %s336, %s338
      %p345 = scmp.eq.s32.totalorder %s34, 1
      %p346 = por %p344, %p345
      %p347 = scmp.ne.s32.totalorder %s338, %s339
      %p348 = scmp.eq.s32.totalorder %s34, 0
      %p349 = por %p347, %p348
      %p350 = scmp.ne.s32.totalorder %s338, %s339
      %p351 = scmp.eq.s32.totalorder %s35, 1
      %p352 = por %p350, %p351
      %p354 = scmp.ne.s32.totalorder %s339, %s353
      %p355 = scmp.eq.s32.totalorder %s35, 0
      %p356 = por %p354, %p355
      %s358 = sadd.s32 %s357, 1
      %p361 = scmp.eq.s32.totalorder %s29, 1
      %p362 = scmp.ne.s32.totalorder %s357, %s359
      %p363 = scmp.eq.s32.totalorder %s29, 0
      %p364 = por %p362, %p363
      %p365 = scmp.ne.s32.totalorder %s357, %s359
      %p366 = scmp.eq.s32.totalorder %s34, 1
      %p367 = por %p365, %p366
      %p368 = scmp.ne.s32.totalorder %s359, %s360
      %p369 = scmp.eq.s32.totalorder %s34, 0
      %p370 = por %p368, %p369
      %p371 = scmp.ne.s32.totalorder %s359, %s360
      %p372 = scmp.eq.s32.totalorder %s35, 1
      %p373 = por %p371, %p372
      %p375 = scmp.ne.s32.totalorder %s360, %s374
      %p376 = scmp.eq.s32.totalorder %s35, 0
      %p377 = por %p375, %p376
      %s379 = sadd.s32 %s378, 1
      %p382 = scmp.eq.s32.totalorder %s29, 1
      %p383 = scmp.ne.s32.totalorder %s378, %s380
      %p384 = scmp.eq.s32.totalorder %s29, 0
      %p385 = por %p383, %p384
      %p386 = scmp.ne.s32.totalorder %s378, %s380
      %p387 = scmp.eq.s32.totalorder %s34, 1
      %p388 = por %p386, %p387
      %p389 = scmp.ne.s32.totalorder %s380, %s381
      %p390 = scmp.eq.s32.totalorder %s34, 0
      %p391 = por %p389, %p390
      %p392 = scmp.ne.s32.totalorder %s380, %s381
      %p393 = scmp.eq.s32.totalorder %s35, 1
      %p394 = por %p392, %p393
      %p396 = scmp.ne.s32.totalorder %s381, %s395
      %p397 = scmp.eq.s32.totalorder %s35, 0
      %p398 = por %p396, %p397
      %s400 = sadd.s32 %s399, 1
      %p403 = scmp.eq.s32.totalorder %s29, 1
      %p404 = scmp.ne.s32.totalorder %s399, %s401
      %p405 = scmp.eq.s32.totalorder %s29, 0
      %p406 = por %p404, %p405
      %p407 = scmp.ne.s32.totalorder %s399, %s401
      %p408 = scmp.eq.s32.totalorder %s34, 1
      %p409 = por %p407, %p408
      %p410 = scmp.ne.s32.totalorder %s401, %s402
      %p411 = scmp.eq.s32.totalorder %s34, 0
      %p412 = por %p410, %p411
      %p413 = scmp.ne.s32.totalorder %s401, %s402
      %p414 = scmp.eq.s32.totalorder %s35, 1
      %p415 = por %p413, %p414
      %p417 = scmp.ne.s32.totalorder %s402, %s416
      %p418 = scmp.eq.s32.totalorder %s35, 0
      %p419 = por %p417, %p418
      %s421 = sadd.s32 %s420, 1
      %p424 = scmp.eq.s32.totalorder %s29, 1
      %p425 = scmp.ne.s32.totalorder %s420, %s422
      %p426 = scmp.eq.s32.totalorder %s29, 0
      %p427 = por %p425, %p426
      %p428 = scmp.ne.s32.totalorder %s420, %s422
      %p429 = scmp.eq.s32.totalorder %s34, 1
      %p430 = por %p428, %p429
      %p431 = scmp.ne.s32.totalorder %s422, %s423
      %p432 = scmp.eq.s32.totalorder %s34, 0
      %p433 = por %p431, %p432
      %p434 = scmp.ne.s32.totalorder %s422, %s423
      %p435 = scmp.eq.s32.totalorder %s35, 1
      %p436 = por %p434, %p435
      %p438 = scmp.ne.s32.totalorder %s423, %s437
      %p439 = scmp.eq.s32.totalorder %s35, 0
      %p440 = por %p438, %p439
      %s442 = sadd.s32 %s441, 1
      %p445 = scmp.eq.s32.totalorder %s29, 1
      %p446 = scmp.ne.s32.totalorder %s441, %s443
      %p447 = scmp.eq.s32.totalorder %s29, 0
      %p448 = por %p446, %p447
      %p449 = scmp.ne.s32.totalorder %s441, %s443
      %p450 = scmp.eq.s32.totalorder %s34, 1
      %p451 = por %p449, %p450
      %p452 = scmp.ne.s32.totalorder %s443, %s444
      %p453 = scmp.eq.s32.totalorder %s34, 0
      %p454 = por %p452, %p453
      %p455 = scmp.ne.s32.totalorder %s443, %s444
      %p456 = scmp.eq.s32.totalorder %s35, 1
      %p457 = por %p455, %p456
      %p459 = scmp.ne.s32.totalorder %s444, %s458
      %p460 = scmp.eq.s32.totalorder %s35, 0
      %p461 = por %p459, %p460
      %s462 = ssub.s32 %s29, %s36
      %p463 = scmp.eq.s32.totalorder %s462, 0
      %s465 = sadd.s32 %s464, 1
      %s466 = scalar_select %p463, %s464, %s465
      %p469 = pneg %p463
      %p470 = scmp.eq.s32.totalorder %s29, 1
      %p471 = por %p469, %p470
      %p472 = scmp.ne.s32.totalorder %s464, %s467
      %p473 = scmp.eq.s32.totalorder %s29, 0
      %p474 = por %p472, %p473
      %p475 = scmp.ne.s32.totalorder %s464, %s467
      %p476 = scmp.eq.s32.totalorder %s34, 1
      %p477 = por %p475, %p476
      %p478 = scmp.ne.s32.totalorder %s467, %s468
      %p479 = scmp.eq.s32.totalorder %s34, 0
      %p480 = por %p478, %p479
      %p481 = scmp.ne.s32.totalorder %s467, %s468
      %p482 = scmp.eq.s32.totalorder %s35, 1
      %p483 = por %p481, %p482
      %p485 = scmp.ne.s32.totalorder %s468, %s484
      %p486 = scmp.eq.s32.totalorder %s35, 0
      %p487 = por %p485, %p486
      %p488 = scmp.le.s32.totalorder 1, %s29
      %p489 = scmp.lt.s32.totalorder %s29, 3
      %p490 = pnand %p488, %p489
      %p491 = pneg %p490
      // Predicated region
      $region9: #{net_forward.1} parent=5 // pred_check
        _
      $region10: #{net_forward.1} parent=5 // pred_check_branch
        %493 = sbr.rel (%p490) target = $region12
      $region11: #{net_forward.1} parent=5 // pred_region
        %s494 = ssub.s32 %s29, 1
        // Predicated region
        $region13: #{net_forward.1} parent=11 // pred_check
          %p495 = pneg %p76
        $region14: #{net_forward.1} parent=11 // pred_check_branch
          %497 = sbr.rel (%p495) target = $region16
        $region15: #{net_forward.1} parent=11 // pred_region
          _
        $region16: #{net_forward.1} parent=11 // pred_fallthru
          _
        // Predicated region
        $region17: #{net_forward.1} parent=11 // pred_check
          %p498 = pneg %p97
        $region18: #{net_forward.1} parent=11 // pred_check_branch
          %500 = sbr.rel (%p498) target = $region20
        $region19: #{net_forward.1} parent=11 // pred_region
          _
        $region20: #{net_forward.1} parent=11 // pred_fallthru
          _
        // Predicated region
        $region21: #{net_forward.1} parent=11 // pred_check
          %p501 = pneg %p118
        $region22: #{net_forward.1} parent=11 // pred_check_branch
          %503 = sbr.rel (%p501) target = $region24
        $region23: #{net_forward.1} parent=11 // pred_region
          _
        $region24: #{net_forward.1} parent=11 // pred_fallthru
          _
        // Predicated region
        $region25: #{net_forward.1} parent=11 // pred_check
          %p504 = pneg %p139
        $region26: #{net_forward.1} parent=11 // pred_check_branch
          %506 = sbr.rel (%p504) target = $region28
        $region27: #{net_forward.1} parent=11 // pred_region
          _
        $region28: #{net_forward.1} parent=11 // pred_fallthru
          _
        // Predicated region
        $region29: #{net_forward.1} parent=11 // pred_check
          %p507 = pneg %p160
        $region30: #{net_forward.1} parent=11 // pred_check_branch
          %509 = sbr.rel (%p507) target = $region32
        $region31: #{net_forward.1} parent=11 // pred_region
          _
        $region32: #{net_forward.1} parent=11 // pred_fallthru
          _
        // Predicated region
        $region33: #{net_forward.1} parent=11 // pred_check
          %p510 = pneg %p181
        $region34: #{net_forward.1} parent=11 // pred_check_branch
          %512 = sbr.rel (%p510) target = $region36
        $region35: #{net_forward.1} parent=11 // pred_region
          _
        $region36: #{net_forward.1} parent=11 // pred_fallthru
          _
        // Predicated region
        $region37: #{net_forward.1} parent=11 // pred_check
          %p513 = pneg %p202
        $region38: #{net_forward.1} parent=11 // pred_check_branch
          %515 = sbr.rel (%p513) target = $region40
        $region39: #{net_forward.1} parent=11 // pred_region
          _
        $region40: #{net_forward.1} parent=11 // pred_fallthru
          _
        // Predicated region
        $region41: #{net_forward.1} parent=11 // pred_check
          %p516 = pneg %p223
        $region42: #{net_forward.1} parent=11 // pred_check_branch
          %518 = sbr.rel (%p516) target = $region44
        $region43: #{net_forward.1} parent=11 // pred_region
          _
        $region44: #{net_forward.1} parent=11 // pred_fallthru
          _
        // Predicated region
        $region45: #{net_forward.1} parent=11 // pred_check
          %p519 = pneg %p244
        $region46: #{net_forward.1} parent=11 // pred_check_branch
          %521 = sbr.rel (%p519) target = $region48
        $region47: #{net_forward.1} parent=11 // pred_region
          _
        $region48: #{net_forward.1} parent=11 // pred_fallthru
          _
        // Predicated region
        $region49: #{net_forward.1} parent=11 // pred_check
          %p522 = pneg %p265
        $region50: #{net_forward.1} parent=11 // pred_check_branch
          %524 = sbr.rel (%p522) target = $region52
        $region51: #{net_forward.1} parent=11 // pred_region
          _
        $region52: #{net_forward.1} parent=11 // pred_fallthru
          _
        // Predicated region
        $region53: #{net_forward.1} parent=11 // pred_check
          %p525 = pneg %p286
        $region54: #{net_forward.1} parent=11 // pred_check_branch
          %527 = sbr.rel (%p525) target = $region56
        $region55: #{net_forward.1} parent=11 // pred_region
          _
        $region56: #{net_forward.1} parent=11 // pred_fallthru
          _
        // Predicated region
        $region57: #{net_forward.1} parent=11 // pred_check
          %p528 = pneg %p307
        $region58: #{net_forward.1} parent=11 // pred_check_branch
          %530 = sbr.rel (%p528) target = $region60
        $region59: #{net_forward.1} parent=11 // pred_region
          _
        $region60: #{net_forward.1} parent=11 // pred_fallthru
          _
        // Predicated region
        $region61: #{net_forward.1} parent=11 // pred_check
          %p531 = pneg %p328
        $region62: #{net_forward.1} parent=11 // pred_check_branch
          %533 = sbr.rel (%p531) target = $region64
        $region63: #{net_forward.1} parent=11 // pred_region
          _
        $region64: #{net_forward.1} parent=11 // pred_fallthru
          _
        // Predicated region
        $region65: #{net_forward.1} parent=11 // pred_check
          %p534 = pneg %p349
        $region66: #{net_forward.1} parent=11 // pred_check_branch
          %536 = sbr.rel (%p534) target = $region68
        $region67: #{net_forward.1} parent=11 // pred_region
          _
        $region68: #{net_forward.1} parent=11 // pred_fallthru
          _
        // Predicated region
        $region69: #{net_forward.1} parent=11 // pred_check
          %p537 = pneg %p370
        $region70: #{net_forward.1} parent=11 // pred_check_branch
          %539 = sbr.rel (%p537) target = $region72
        $region71: #{net_forward.1} parent=11 // pred_region
          _
        $region72: #{net_forward.1} parent=11 // pred_fallthru
          _
        // Predicated region
        $region73: #{net_forward.1} parent=11 // pred_check
          %p540 = pneg %p391
        $region74: #{net_forward.1} parent=11 // pred_check_branch
          %542 = sbr.rel (%p540) target = $region76
        $region75: #{net_forward.1} parent=11 // pred_region
          _
        $region76: #{net_forward.1} parent=11 // pred_fallthru
          _
        // Predicated region
        $region77: #{net_forward.1} parent=11 // pred_check
          %p543 = pneg %p412
        $region78: #{net_forward.1} parent=11 // pred_check_branch
          %545 = sbr.rel (%p543) target = $region80
        $region79: #{net_forward.1} parent=11 // pred_region
          _
        $region80: #{net_forward.1} parent=11 // pred_fallthru
          _
        // Predicated region
        $region81: #{net_forward.1} parent=11 // pred_check
          %p546 = pneg %p433
        $region82: #{net_forward.1} parent=11 // pred_check_branch
          %548 = sbr.rel (%p546) target = $region84
        $region83: #{net_forward.1} parent=11 // pred_region
          _
        $region84: #{net_forward.1} parent=11 // pred_fallthru
          _
        // Predicated region
        $region85: #{net_forward.1} parent=11 // pred_check
          %p549 = pneg %p454
        $region86: #{net_forward.1} parent=11 // pred_check_branch
          %551 = sbr.rel (%p549) target = $region88
        $region87: #{net_forward.1} parent=11 // pred_region
          _
        $region88: #{net_forward.1} parent=11 // pred_fallthru
          _
      $region12: #{net_forward.1} parent=5 // pred_fallthru
        _
      %p552 = scmp.lt.s32.totalorder %s29, 2
      // Predicated region
      $region89: #{net_forward.1} parent=5 // pred_check
        %p553 = pneg %p552
      $region90: #{net_forward.1} parent=5 // pred_check_branch
        %555 = sbr.rel (%p553) target = $region92
      $region91: #{net_forward.1} parent=5 // pred_region
        // Predicated region
        $region93: #{net_forward.1} parent=91 // pred_check
          %p556 = pneg %p49
        $region94: #{net_forward.1} parent=91 // pred_check_branch
          %558 = sbr.rel (%p556) target = $region96
        $region95: #{net_forward.1} parent=91 // pred_region
          %p559 = scmp.lt.s32.totalorder %s29, 1
          %s560 = scalar_select %p559, %s29, 1
          %s561 = smul.addr %s560, 8
          %s562 = smul.addr %s561, 8
          %s563 = scalar_lea.vmem %s0, %s562
        $region96: #{net_forward.1} parent=91 // pred_fallthru
          _
      $region92: #{net_forward.1} parent=5 // pred_fallthru
        _
      %p564 = scmp.le.s32.totalorder 1, %s29
      %p565 = scmp.lt.s32.totalorder %s29, 3
      %p566 = pnand %p564, %p565
      %p567 = pneg %p566
      // Predicated region
      $region97: #{net_forward.1} parent=5 // pred_check
        _
      $region98: #{net_forward.1} parent=5 // pred_check_branch
        %569 = sbr.rel (%p566) target = $region100
      $region99: #{net_forward.1} parent=5 // pred_region
        %s570 = ssub.s32 %s29, 1
        %p571 = scmp.lt.s32.totalorder %s34, 1
        %s572 = scalar_select %p571, %s34, 1
        %s573 = smul.addr %s572, 8
        %s574 = smul.addr %s573, 8
        %s575 = scalar_lea.vmem %s0, %s574
        %p576 = pneg %p55
        %p577 = pneg %p52
        %p578 = pneg %p76
        %p579 = pneg %p73
        %p580 = pneg %p97
        %p581 = pneg %p94
        %p582 = pneg %p118
        %p583 = pneg %p115
        %p584 = pneg %p139
        %p585 = pneg %p136
        %p586 = pneg %p160
        %p587 = pneg %p157
        %p588 = pneg %p181
        %p589 = pneg %p178
        %p590 = pneg %p202
        %p591 = pneg %p199
        %p592 = pneg %p223
        %p593 = pneg %p220
        %p594 = pneg %p244
        %p595 = pneg %p241
        %p596 = pneg %p265
        %p597 = pneg %p262
        %p598 = pneg %p286
        %p599 = pneg %p283
        %p600 = pneg %p307
        %p601 = pneg %p304
        %p602 = pneg %p328
        %p603 = pneg %p325
        %p604 = pneg %p349
        %p605 = pneg %p346
        %p606 = pneg %p370
        %p607 = pneg %p367
        %p608 = pneg %p391
        %p609 = pneg %p388
        %p610 = pneg %p412
        %p611 = pneg %p409
        %p612 = pneg %p433
        %p613 = pneg %p430
        %p614 = pneg %p454
        %p615 = pneg %p451
        %p616 = pneg %p480
        %p617 = pneg %p477
        %s618 = sand.u32 %s467, 1
        %s619 = scalar_lea.sflag [#allocation3], %s618
        %s620 = sand.u32 %s467, 1
        %s621 = smul.addr %s620, 4
        %s622 = scalar_lea.vmem [#allocation2], %s621
        %p623 = scmp.lt.s32.totalorder %s34, 1
        %s624 = scalar_select %p623, %s34, 1
        %s625 = smul.addr %s624, 8
        %s626 = smul.addr %s625, 8
        %s627 = scalar_lea.vmem %s0, %s626
        %v629 = vld [vmem:[%s627] sm:$0xff]
        %v630 = vld [vmem:[%s627 + $0x8] sm:$0xff]
        %v631 = vld [vmem:[%s627 + $0x10] sm:$0xff]
        %v632 = vld [vmem:[%s627 + $0x18] sm:$0xff]
        %v633 = vld [vmem:[%s627 + $0x20] sm:$0xff]
        %v634 = vld [vmem:[%s627 + $0x28] sm:$0xff]
        %v635 = vld [vmem:[%s627 + $0x30] sm:$0xff]
        %v636 = vld [vmem:[%s627 + $0x38] sm:$0xff]
        %v637 = vpack.c.bf16 %v630, %v629
        %v638 = vpack.c.bf16 %v632, %v631
        %v639 = vpack.c.bf16 %v634, %v633
        %v640 = vpack.c.bf16 %v636, %v635
        %v641 = vld [vmem:[%s1] sm:$0xf]
        %v642 = vld [vmem:[%s1 + $0x4] sm:$0xf]
        %s643 = scalar_lea.vmem %s1, 8
        %v644 = vld [vmem:[%s643] sm:$0xf]
        %v645 = vld [vmem:[%s643 + $0x4] sm:$0xf]
        %vm646 = vsmask.f32 7424
        %v648 = vshrl.u32 %v637, 16
        %v650 = vshll.u32 %v637, 16
        %v652 = vrot.slane %v650, 1
        %v653 = vor.u32 %v648, %v652
        %v655 = vshll.u32 %v638, 16
        %v657 = vrot.slane %v655, 1
        %v658 = vsel %vm646, %v653, %v657
        %v659 = vshrl.u32 %v638, 16
        %v661 = vor.u32 %v659, %v657
        %v663 = vshll.u32 %v639, 16
        %v665 = vrot.slane %v663, 1
        %v666 = vsel %vm646, %v661, %v665
        %v667 = vshrl.u32 %v639, 16
        %v669 = vor.u32 %v667, %v665
        %v671 = vshll.u32 %v640, 16
        %v673 = vrot.slane %v671, 1
        %v674 = vsel %vm646, %v669, %v673
        %v675 = vshrl.u32 %v640, 16
        %v677 = vor.u32 %v675, %v673
        %v680 = vunpack.c.l.b16 %v644
        %v681 = vunpack.c.l.b16 %v645
        %v682 = vpack.c.b16 %v681, %v680
        %vm684 = vcmask 130048
        %v686 = vsel %vm684, %v658, 0
        %v689 = vsel %vm684, %v666, 0
        %v692 = vsel %vm684, %v674, 0
        %v695 = vsel %vm684, %v677, 0
        %697 = vmatpush.bf16.msra.mxu0 0
        %698 = vmatpush.bf16.msra.mxu0 0
        %699 = vmatpush.bf16.msra.mxu0 0
        %700 = vmatpush.bf16.msra.mxu0 0
        %701 = vmatpush.bf16.msra.mxu0 0
        %702 = vmatpush.bf16.msra.mxu0 0
        %703 = vmatpush.bf16.msra.mxu0 0
        %704 = vmatpush.bf16.msra.mxu0 %v682
        %705 = vmatmul.bf16.gmra.mxu0 %v686
        %v706 = vpop.f32.mrf.mxu0
        %v707 = vadd.f32 0.0, %v706
        %v708 = vpop.f32.mrf.mxu0
        %v709 = vadd.f32 0.0, %v708
        %710 = vmatmul.bf16.gmra.mxu0 %v689
        %v711 = vpop.f32.mrf.mxu0
        %v712 = vadd.f32 0.0, %v711
        %v713 = vpop.f32.mrf.mxu0
        %v714 = vadd.f32 0.0, %v713
        %715 = vmatmul.bf16.gmra.mxu0 %v692
        %v716 = vpop.f32.mrf.mxu0
        %v717 = vadd.f32 0.0, %v716
        %v718 = vpop.f32.mrf.mxu0
        %v719 = vadd.f32 0.0, %v718
        %720 = vmatmul.bf16.gmra.mxu0 %v695
        %v721 = vpop.f32.mrf.mxu0
        %v722 = vadd.f32 0.0, %v721
        %v723 = vpop.f32.mrf.mxu0
        %v724 = vadd.f32 0.0, %v723
        %725 = vdwg.mxu0
        %v728 = vunpack.c.l.b16 %v641
        %v729 = vunpack.c.l.b16 %v642
        %v730 = vpack.c.b16 %v729, %v728
        %v732 = vsel %vm684, %v637, 0
        %v734 = vsel %vm684, %v638, 0
        %v736 = vsel %vm684, %v639, 0
        %v738 = vsel %vm684, %v640, 0
        %740 = vmatpush.bf16.msra.mxu0 0
        %741 = vmatpush.bf16.msra.mxu0 0
        %742 = vmatpush.bf16.msra.mxu0 0
        %743 = vmatpush.bf16.msra.mxu0 0
        %744 = vmatpush.bf16.msra.mxu0 0
        %745 = vmatpush.bf16.msra.mxu0 0
        %746 = vmatpush.bf16.msra.mxu0 0
        %747 = vmatpush.bf16.msra.mxu0 %v730
        %748 = vmatmul.bf16.gmra.mxu0 %v732
        %v749 = vpop.f32.mrf.mxu0
        %v750 = vadd.f32 %v707, %v749
        %v751 = vpop.f32.mrf.mxu0
        %v752 = vadd.f32 %v709, %v751
        %753 = vmatmul.bf16.gmra.mxu0 %v734
        %v754 = vpop.f32.mrf.mxu0
        %v755 = vadd.f32 %v712, %v754
        %v756 = vpop.f32.mrf.mxu0
        %v757 = vadd.f32 %v714, %v756
        %758 = vmatmul.bf16.gmra.mxu0 %v736
        %v759 = vpop.f32.mrf.mxu0
        %v760 = vadd.f32 %v717, %v759
        %v761 = vpop.f32.mrf.mxu0
        %v762 = vadd.f32 %v719, %v761
        %763 = vmatmul.bf16.gmra.mxu0 %v738
        %v764 = vpop.f32.mrf.mxu0
        %v765 = vadd.f32 %v722, %v764
        %v766 = vpop.f32.mrf.mxu0
        %v767 = vadd.f32 %v724, %v766
        %768 = vdwg.mxu0
        %s769 = scalar_lea.vmem %s1, 16
        %v770 = vld [vmem:[%s769] sm:$0xf]
        %v771 = vld [vmem:[%s769 + $0x4] sm:$0xf]
        %vm776 = vcmask 1046528
        %v777 = vrot.slane %v637, 1
        %v778 = vrot.slane %v638, 1
        %v779 = vsel %vm776, %v777, %v778
        %v780 = vrot.slane %v639, 1
        %v781 = vsel %vm776, %v778, %v780
        %v782 = vrot.slane %v640, 1
        %v783 = vsel %vm776, %v780, %v782
        %v786 = vunpack.c.l.b16 %v770
        %v787 = vunpack.c.l.b16 %v771
        %v788 = vpack.c.b16 %v787, %v786
        %v791 = vsel %vm684, %v779, 0
        %v794 = vsel %vm684, %v781, 0
        %v797 = vsel %vm684, %v783, 0
        %v800 = vsel %vm684, %v782, 0
        %802 = vmatpush.bf16.msra.mxu0 0
        %803 = vmatpush.bf16.msra.mxu0 0
        %804 = vmatpush.bf16.msra.mxu0 0
        %805 = vmatpush.bf16.msra.mxu0 0
        %806 = vmatpush.bf16.msra.mxu0 0
        %807 = vmatpush.bf16.msra.mxu0 0
        %808 = vmatpush.bf16.msra.mxu0 0
        %809 = vmatpush.bf16.msra.mxu0 %v788
        %810 = vmatmul.bf16.gmra.mxu0 %v791
        %v811 = vpop.f32.mrf.mxu0
        %v812 = vadd.f32 0.0, %v811
        %v813 = vpop.f32.mrf.mxu0
        %v814 = vadd.f32 0.0, %v813
        %815 = vmatmul.bf16.gmra.mxu0 %v794
        %v816 = vpop.f32.mrf.mxu0
        %v817 = vadd.f32 0.0, %v816
        %v818 = vpop.f32.mrf.mxu0
        %v819 = vadd.f32 0.0, %v818
        %820 = vmatmul.bf16.gmra.mxu0 %v797
        %v821 = vpop.f32.mrf.mxu0
        %v822 = vadd.f32 0.0, %v821
        %v823 = vpop.f32.mrf.mxu0
        %v824 = vadd.f32 0.0, %v823
        %825 = vmatmul.bf16.gmra.mxu0 %v800
        %v826 = vpop.f32.mrf.mxu0
        %v827 = vadd.f32 0.0, %v826
        %v828 = vpop.f32.mrf.mxu0
        %v829 = vadd.f32 0.0, %v828
        %830 = vdwg.mxu0
        %v831 = vadd.f32 %v750, %v812
        %v832 = vadd.f32 %v752, %v814
        %v833 = vadd.f32 %v755, %v817
        %v834 = vadd.f32 %v757, %v819
        %v835 = vadd.f32 %v760, %v822
        %v836 = vadd.f32 %v762, %v824
        %v837 = vadd.f32 %v765, %v827
        %v838 = vadd.f32 %v767, %v829
        %v839 = vmax.f32 %v831, 0.0
        %v840 = vmax.f32 %v832, 0.0
        %v841 = vmax.f32 %v833, 0.0
        %v842 = vmax.f32 %v834, 0.0
        %v843 = vmax.f32 %v835, 0.0
        %v844 = vmax.f32 %v836, 0.0
        %v845 = vmax.f32 %v837, 0.0
        %v846 = vmax.f32 %v838, 0.0
        %v847 = vld [vmem:[%s2] sm:$0x1]
        %v849 = vperm.slane %v847, 0
        %v851 = vmul.f32 %v839, %v849
        %v852 = vmul.f32 %v840, %v849
        %v853 = vmul.f32 %v841, %v849
        %v854 = vmul.f32 %v842, %v849
        %v855 = vmul.f32 %v843, %v849
        %v856 = vmul.f32 %v844, %v849
        %v857 = vmul.f32 %v845, %v849
        %v858 = vmul.f32 %v846, %v849
        %v859 = vld [vmem:[%s3] sm:$0x1]
        %v861 = vperm.slane %v859, 0
        %v863 = vadd.f32 %v851, %v861
        %v864 = vadd.f32 %v852, %v861
        %v865 = vadd.f32 %v853, %v861
        %v866 = vadd.f32 %v854, %v861
        %v867 = vadd.f32 %v855, %v861
        %v868 = vadd.f32 %v856, %v861
        %v869 = vadd.f32 %v857, %v861
        %v870 = vadd.f32 %v858, %v861
        %v871 = vpack.c.bf16 %v864, %v863
        %v872 = vpack.c.bf16 %v866, %v865
        %v873 = vpack.c.bf16 %v868, %v867
        %v874 = vpack.c.bf16 %v870, %v869
        %v875 = vld [vmem:[%s4] sm:$0xff]
        %v876 = vld [vmem:[%s4 + $0x8] sm:$0xff]
        %v877 = vld [vmem:[%s4 + $0x10] sm:$0xff]
        %v878 = vld [vmem:[%s4 + $0x18] sm:$0xff]
        %v879 = vld [vmem:[%s4 + $0x20] sm:$0xff]
        %v880 = vld [vmem:[%s4 + $0x28] sm:$0xff]
        %v881 = vld [vmem:[%s4 + $0x30] sm:$0xff]
        %v882 = vld [vmem:[%s4 + $0x38] sm:$0xff]
        %v883 = vld [vmem:[%s4 + $0x40] sm:$0xff]
        %v884 = vld [vmem:[%s4 + $0x48] sm:$0xff]
        %v885 = vld [vmem:[%s4 + $0x50] sm:$0xff]
        %v886 = vld [vmem:[%s4 + $0x58] sm:$0xff]
        %v887 = vld [vmem:[%s4 + $0x60] sm:$0xff]
        %v888 = vld [vmem:[%s4 + $0x68] sm:$0xff]
        %s889 = scalar_lea.vmem %s4, 112
        %v890 = vld [vmem:[%s889] sm:$0xff]
        %v891 = vld [vmem:[%s889 + $0x8] sm:$0xff]
        %v892 = vld [vmem:[%s889 + $0x10] sm:$0xff]
        %v893 = vld [vmem:[%s889 + $0x18] sm:$0xff]
        %v894 = vld [vmem:[%s889 + $0x20] sm:$0xff]
        %v895 = vld [vmem:[%s889 + $0x28] sm:$0xff]
        %v896 = vld [vmem:[%s889 + $0x30] sm:$0xff]
        %v897 = vld [vmem:[%s889 + $0x38] sm:$0xff]
        %v898 = vld [vmem:[%s889 + $0x40] sm:$0xff]
        %v899 = vld [vmem:[%s889 + $0x48] sm:$0xff]
        %v900 = vld [vmem:[%s889 + $0x50] sm:$0xff]
        %v901 = vld [vmem:[%s889 + $0x58] sm:$0xff]
        %v902 = vld [vmem:[%s889 + $0x60] sm:$0xff]
        %v903 = vld [vmem:[%s889 + $0x68] sm:$0xff]
        %v905 = vshrl.u32 %v871, 16
        %v907 = vshll.u32 %v871, 16
        %v909 = vrot.slane %v907, 1
        %v910 = vor.u32 %v905, %v909
        %v912 = vshll.u32 %v872, 16
        %v914 = vrot.slane %v912, 1
        %v915 = vsel %vm646, %v910, %v914
        %v916 = vshrl.u32 %v872, 16
        %v918 = vor.u32 %v916, %v914
        %v920 = vshll.u32 %v873, 16
        %v922 = vrot.slane %v920, 1
        %v923 = vsel %vm646, %v918, %v922
        %v924 = vshrl.u32 %v873, 16
        %v926 = vor.u32 %v924, %v922
        %v928 = vshll.u32 %v874, 16
        %v930 = vrot.slane %v928, 1
        %v931 = vsel %vm646, %v926, %v930
        %v932 = vshrl.u32 %v874, 16
        %v934 = vor.u32 %v932, %v930
        %v949 = vunpack.c.l.b16 %v890
        %v950 = vunpack.c.h.b16 %v890
        %v951 = vunpack.c.l.b16 %v891
        %v952 = vunpack.c.h.b16 %v891
        %v953 = vunpack.c.l.b16 %v892
        %v954 = vunpack.c.h.b16 %v892
        %v955 = vunpack.c.l.b16 %v893
        %v956 = vunpack.c.h.b16 %v893
        %v957 = vunpack.c.l.b16 %v894
        %v958 = vunpack.c.h.b16 %v894
        %v959 = vunpack.c.l.b16 %v895
        %v960 = vunpack.c.h.b16 %v895
        %v961 = vunpack.c.l.b16 %v896
        %v962 = vunpack.c.h.b16 %v896
        %v963 = vunpack.c.l.b16 %v897
        %v964 = vunpack.c.h.b16 %v897
        %v965 = vunpack.c.l.b16 %v898
        %v966 = vunpack.c.h.b16 %v898
        %v967 = vunpack.c.l.b16 %v899
        %v968 = vunpack.c.h.b16 %v899
        %v969 = vunpack.c.l.b16 %v900
        %v970 = vunpack.c.h.b16 %v900
        %v971 = vunpack.c.l.b16 %v901
        %v972 = vunpack.c.h.b16 %v901
        %v973 = vunpack.c.l.b16 %v902
        %v974 = vunpack.c.h.b16 %v902
        %v975 = vunpack.c.l.b16 %v903
        %v976 = vunpack.c.h.b16 %v903
        %v977 = vpack.c.b16 %v951, %v949
        %v978 = vpack.c.b16 %v952, %v950
        %v979 = vpack.c.b16 %v955, %v953
        %v980 = vpack.c.b16 %v956, %v954
        %v981 = vpack.c.b16 %v959, %v957
        %v982 = vpack.c.b16 %v960, %v958
        %v983 = vpack.c.b16 %v963, %v961
        %v984 = vpack.c.b16 %v964, %v962
        %v985 = vpack.c.b16 %v967, %v965
        %v986 = vpack.c.b16 %v968, %v966
        %v987 = vpack.c.b16 %v971, %v969
        %v988 = vpack.c.b16 %v972, %v970
        %v989 = vpack.c.b16 %v975, %v973
        %v990 = vpack.c.b16 %v976, %v974
        %vm1005 = vcmask 916480
        %v1007 = vsel %vm1005, %v915, 0
        %v1010 = vsel %vm1005, %v923, 0
        %v1013 = vsel %vm1005, %v931, 0
        %v1016 = vsel %vm1005, %v934, 0
        %1018 = vmatpush.bf16.msra.mxu0 0
        %1019 = vmatpush.bf16.msra.mxu0 %v989
        %1020 = vmatpush.bf16.msra.mxu0 %v987
        %1021 = vmatpush.bf16.msra.mxu0 %v985
        %1022 = vmatpush.bf16.msra.mxu0 %v983
        %1023 = vmatpush.bf16.msra.mxu0 %v981
        %1024 = vmatpush.bf16.msra.mxu0 %v979
        %1025 = vmatpush.bf16.msra.mxu0 %v977
        %1026 = vmatmul.bf16.gmra.mxu0 %v1007
        %v1027 = vpop.f32.mrf.mxu0
        %v1028 = vadd.f32 0.0, %v1027
        %v1029 = vpop.f32.mrf.mxu0
        %v1030 = vadd.f32 0.0, %v1029
        %1031 = vmatmul.bf16.gmra.mxu0 %v1010
        %v1032 = vpop.f32.mrf.mxu0
        %v1033 = vadd.f32 0.0, %v1032
        %v1034 = vpop.f32.mrf.mxu0
        %v1035 = vadd.f32 0.0, %v1034
        %1036 = vmatmul.bf16.gmra.mxu0 %v1013
        %v1037 = vpop.f32.mrf.mxu0
        %v1038 = vadd.f32 0.0, %v1037
        %v1039 = vpop.f32.mrf.mxu0
        %v1040 = vadd.f32 0.0, %v1039
        %1041 = vmatmul.bf16.gmra.mxu0 %v1016
        %v1042 = vpop.f32.mrf.mxu0
        %v1043 = vadd.f32 0.0, %v1042
        %v1044 = vpop.f32.mrf.mxu0
        %v1045 = vadd.f32 0.0, %v1044
        %1046 = vdwg.mxu0
        %1047 = vmatpush.bf16.msra.mxu0 0
        %1048 = vmatpush.bf16.msra.mxu0 %v990
        %1049 = vmatpush.bf16.msra.mxu0 %v988
        %1050 = vmatpush.bf16.msra.mxu0 %v986
        %1051 = vmatpush.bf16.msra.mxu0 %v984
        %1052 = vmatpush.bf16.msra.mxu0 %v982
        %1053 = vmatpush.bf16.msra.mxu0 %v980
        %1054 = vmatpush.bf16.msra.mxu0 %v978
        %1055 = vmatmul.bf16.gmra.mxu0 %v1007
        %v1056 = vpop.f32.mrf.mxu0
        %v1057 = vadd.f32 0.0, %v1056
        %v1058 = vpop.f32.mrf.mxu0
        %v1059 = vadd.f32 0.0, %v1058
        %1060 = vmatmul.bf16.gmra.mxu0 %v1010
        %v1061 = vpop.f32.mrf.mxu0
        %v1062 = vadd.f32 0.0, %v1061
        %v1063 = vpop.f32.mrf.mxu0
        %v1064 = vadd.f32 0.0, %v1063
        %1065 = vmatmul.bf16.gmra.mxu0 %v1013
        %v1066 = vpop.f32.mrf.mxu0
        %v1067 = vadd.f32 0.0, %v1066
        %v1068 = vpop.f32.mrf.mxu0
        %v1069 = vadd.f32 0.0, %v1068
        %1070 = vmatmul.bf16.gmra.mxu0 %v1016
        %v1071 = vpop.f32.mrf.mxu0
        %v1072 = vadd.f32 0.0, %v1071
        %v1073 = vpop.f32.mrf.mxu0
        %v1074 = vadd.f32 0.0, %v1073
        %1075 = vdwg.mxu0
        %v1090 = vunpack.c.l.b16 %v875
        %v1091 = vunpack.c.h.b16 %v875
        %v1092 = vunpack.c.l.b16 %v876
        %v1093 = vunpack.c.h.b16 %v876
        %v1094 = vunpack.c.l.b16 %v877
        %v1095 = vunpack.c.h.b16 %v877
        %v1096 = vunpack.c.l.b16 %v878
        %v1097 = vunpack.c.h.b16 %v878
        %v1098 = vunpack.c.l.b16 %v879
        %v1099 = vunpack.c.h.b16 %v879
        %v1100 = vunpack.c.l.b16 %v880
        %v1101 = vunpack.c.h.b16 %v880
        %v1102 = vunpack.c.l.b16 %v881
        %v1103 = vunpack.c.h.b16 %v881
        %v1104 = vunpack.c.l.b16 %v882
        %v1105 = vunpack.c.h.b16 %v882
        %v1106 = vunpack.c.l.b16 %v883
        %v1107 = vunpack.c.h.b16 %v883
        %v1108 = vunpack.c.l.b16 %v884
        %v1109 = vunpack.c.h.b16 %v884
        %v1110 = vunpack.c.l.b16 %v885
        %v1111 = vunpack.c.h.b16 %v885
        %v1112 = vunpack.c.l.b16 %v886
        %v1113 = vunpack.c.h.b16 %v886
        %v1114 = vunpack.c.l.b16 %v887
        %v1115 = vunpack.c.h.b16 %v887
        %v1116 = vunpack.c.l.b16 %v888
        %v1117 = vunpack.c.h.b16 %v888
        %v1118 = vpack.c.b16 %v1092, %v1090
        %v1119 = vpack.c.b16 %v1093, %v1091
        %v1120 = vpack.c.b16 %v1096, %v1094
        %v1121 = vpack.c.b16 %v1097, %v1095
        %v1122 = vpack.c.b16 %v1100, %v1098
        %v1123 = vpack.c.b16 %v1101, %v1099
        %v1124 = vpack.c.b16 %v1104, %v1102
        %v1125 = vpack.c.b16 %v1105, %v1103
        %v1126 = vpack.c.b16 %v1108, %v1106
        %v1127 = vpack.c.b16 %v1109, %v1107
        %v1128 = vpack.c.b16 %v1112, %v1110
        %v1129 = vpack.c.b16 %v1113, %v1111
        %v1130 = vpack.c.b16 %v1116, %v1114
        %v1131 = vpack.c.b16 %v1117, %v1115
        %v1146 = vsel %vm1005, %v871, 0
        %v1148 = vsel %vm1005, %v872, 0
        %v1150 = vsel %vm1005, %v873, 0
        %v1152 = vsel %vm1005, %v874, 0
        %1154 = vmatpush.bf16.msra.mxu0 0
        %1155 = vmatpush.bf16.msra.mxu0 %v1130
        %1156 = vmatpush.bf16.msra.mxu0 %v1128
        %1157 = vmatpush.bf16.msra.mxu0 %v1126
        %1158 = vmatpush.bf16.msra.mxu0 %v1124
        %1159 = vmatpush.bf16.msra.mxu0 %v1122
        %1160 = vmatpush.bf16.msra.mxu0 %v1120
        %1161 = vmatpush.bf16.msra.mxu0 %v1118
        %1162 = vmatmul.bf16.gmra.mxu0 %v1146
        %v1163 = vpop.f32.mrf.mxu0
        %v1164 = vadd.f32 %v1028, %v1163
        %v1165 = vpop.f32.mrf.mxu0
        %v1166 = vadd.f32 %v1030, %v1165
        %1167 = vmatmul.bf16.gmra.mxu0 %v1148
        %v1168 = vpop.f32.mrf.mxu0
        %v1169 = vadd.f32 %v1033, %v1168
        %v1170 = vpop.f32.mrf.mxu0
        %v1171 = vadd.f32 %v1035, %v1170
        %1172 = vmatmul.bf16.gmra.mxu0 %v1150
        %v1173 = vpop.f32.mrf.mxu0
        %v1174 = vadd.f32 %v1038, %v1173
        %v1175 = vpop.f32.mrf.mxu0
        %v1176 = vadd.f32 %v1040, %v1175
        %1177 = vmatmul.bf16.gmra.mxu0 %v1152
        %v1178 = vpop.f32.mrf.mxu0
        %v1179 = vadd.f32 %v1043, %v1178
        %v1180 = vpop.f32.mrf.mxu0
        %v1181 = vadd.f32 %v1045, %v1180
        %1182 = vdwg.mxu0
        %1183 = vmatpush.bf16.msra.mxu0 0
        %1184 = vmatpush.bf16.msra.mxu0 %v1131
        %1185 = vmatpush.bf16.msra.mxu0 %v1129
        %1186 = vmatpush.bf16.msra.mxu0 %v1127
        %1187 = vmatpush.bf16.msra.mxu0 %v1125
        %1188 = vmatpush.bf16.msra.mxu0 %v1123
        %1189 = vmatpush.bf16.msra.mxu0 %v1121
        %1190 = vmatpush.bf16.msra.mxu0 %v1119
        %1191 = vmatmul.bf16.gmra.mxu0 %v1146
        %v1192 = vpop.f32.mrf.mxu0
        %v1193 = vadd.f32 %v1057, %v1192
        %v1194 = vpop.f32.mrf.mxu0
        %v1195 = vadd.f32 %v1059, %v1194
        %1196 = vmatmul.bf16.gmra.mxu0 %v1148
        %v1197 = vpop.f32.mrf.mxu0
        %v1198 = vadd.f32 %v1062, %v1197
        %v1199 = vpop.f32.mrf.mxu0
        %v1200 = vadd.f32 %v1064, %v1199
        %1201 = vmatmul.bf16.gmra.mxu0 %v1150
        %v1202 = vpop.f32.mrf.mxu0
        %v1203 = vadd.f32 %v1067, %v1202
        %v1204 = vpop.f32.mrf.mxu0
        %v1205 = vadd.f32 %v1069, %v1204
        %1206 = vmatmul.bf16.gmra.mxu0 %v1152
        %v1207 = vpop.f32.mrf.mxu0
        %v1208 = vadd.f32 %v1072, %v1207
        %v1209 = vpop.f32.mrf.mxu0
        %v1210 = vadd.f32 %v1074, %v1209
        %1211 = vdwg.mxu0
        %s1212 = scalar_lea.vmem %s4, 224
        %v1213 = vld [vmem:[%s1212] sm:$0xff]
        %v1214 = vld [vmem:[%s1212 + $0x8] sm:$0xff]
        %v1215 = vld [vmem:[%s1212 + $0x10] sm:$0xff]
        %v1216 = vld [vmem:[%s1212 + $0x18] sm:$0xff]
        %v1217 = vld [vmem:[%s1212 + $0x20] sm:$0xff]
        %v1218 = vld [vmem:[%s1212 + $0x28] sm:$0xff]
        %v1219 = vld [vmem:[%s1212 + $0x30] sm:$0xff]
        %v1220 = vld [vmem:[%s1212 + $0x38] sm:$0xff]
        %v1221 = vld [vmem:[%s1212 + $0x40] sm:$0xff]
        %v1222 = vld [vmem:[%s1212 + $0x48] sm:$0xff]
        %v1223 = vld [vmem:[%s1212 + $0x50] sm:$0xff]
        %v1224 = vld [vmem:[%s1212 + $0x58] sm:$0xff]
        %v1225 = vld [vmem:[%s1212 + $0x60] sm:$0xff]
        %v1226 = vld [vmem:[%s1212 + $0x68] sm:$0xff]
        %v1231 = vrot.slane %v871, 1
        %v1232 = vrot.slane %v872, 1
        %v1233 = vsel %vm776, %v1231, %v1232
        %v1234 = vrot.slane %v873, 1
        %v1235 = vsel %vm776, %v1232, %v1234
        %v1236 = vrot.slane %v874, 1
        %v1237 = vsel %vm776, %v1234, %v1236
        %v1252 = vunpack.c.l.b16 %v1213
        %v1253 = vunpack.c.h.b16 %v1213
        %v1254 = vunpack.c.l.b16 %v1214
        %v1255 = vunpack.c.h.b16 %v1214
        %v1256 = vunpack.c.l.b16 %v1215
        %v1257 = vunpack.c.h.b16 %v1215
        %v1258 = vunpack.c.l.b16 %v1216
        %v1259 = vunpack.c.h.b16 %v1216
        %v1260 = vunpack.c.l.b16 %v1217
        %v1261 = vunpack.c.h.b16 %v1217
        %v1262 = vunpack.c.l.b16 %v1218
        %v1263 = vunpack.c.h.b16 %v1218
        %v1264 = vunpack.c.l.b16 %v1219
        %v1265 = vunpack.c.h.b16 %v1219
        %v1266 = vunpack.c.l.b16 %v1220
        %v1267 = vunpack.c.h.b16 %v1220
        %v1268 = vunpack.c.l.b16 %v1221
        %v1269 = vunpack.c.h.b16 %v1221
        %v1270 = vunpack.c.l.b16 %v1222
        %v1271 = vunpack.c.h.b16 %v1222
        %v1272 = vunpack.c.l.b16 %v1223
        %v1273 = vunpack.c.h.b16 %v1223
        %v1274 = vunpack.c.l.b16 %v1224
        %v1275 = vunpack.c.h.b16 %v1224
        %v1276 = vunpack.c.l.b16 %v1225
        %v1277 = vunpack.c.h.b16 %v1225
        %v1278 = vunpack.c.l.b16 %v1226
        %v1279 = vunpack.c.h.b16 %v1226
        %v1280 = vpack.c.b16 %v1254, %v1252
        %v1281 = vpack.c.b16 %v1255, %v1253
        %v1282 = vpack.c.b16 %v1258, %v1256
        %v1283 = vpack.c.b16 %v1259, %v1257
        %v1284 = vpack.c.b16 %v1262, %v1260
        %v1285 = vpack.c.b16 %v1263, %v1261
        %v1286 = vpack.c.b16 %v1266, %v1264
        %v1287 = vpack.c.b16 %v1267, %v1265
        %v1288 = vpack.c.b16 %v1270, %v1268
        %v1289 = vpack.c.b16 %v1271, %v1269
        %v1290 = vpack.c.b16 %v1274, %v1272
        %v1291 = vpack.c.b16 %v1275, %v1273
        %v1292 = vpack.c.b16 %v1278, %v1276
        %v1293 = vpack.c.b16 %v1279, %v1277
        %v1309 = vsel %vm1005, %v1233, 0
        %v1312 = vsel %vm1005, %v1235, 0
        %v1315 = vsel %vm1005, %v1237, 0
        %v1318 = vsel %vm1005, %v1236, 0
        %1320 = vmatpush.bf16.msra.mxu0 0
        %1321 = vmatpush.bf16.msra.mxu0 %v1292
        %1322 = vmatpush.bf16.msra.mxu0 %v1290
        %1323 = vmatpush.bf16.msra.mxu0 %v1288
        %1324 = vmatpush.bf16.msra.mxu0 %v1286
        %1325 = vmatpush.bf16.msra.mxu0 %v1284
        %1326 = vmatpush.bf16.msra.mxu0 %v1282
        %1327 = vmatpush.bf16.msra.mxu0 %v1280
        %1328 = vmatmul.bf16.gmra.mxu0 %v1309
        %v1329 = vpop.f32.mrf.mxu0
        %v1330 = vadd.f32 0.0, %v1329
        %v1331 = vpop.f32.mrf.mxu0
        %v1332 = vadd.f32 0.0, %v1331
        %1333 = vmatmul.bf16.gmra.mxu0 %v1312
        %v1334 = vpop.f32.mrf.mxu0
        %v1335 = vadd.f32 0.0, %v1334
        %v1336 = vpop.f32.mrf.mxu0
        %v1337 = vadd.f32 0.0, %v1336
        %1338 = vmatmul.bf16.gmra.mxu0 %v1315
        %v1339 = vpop.f32.mrf.mxu0
        %v1340 = vadd.f32 0.0, %v1339
        %v1341 = vpop.f32.mrf.mxu0
        %v1342 = vadd.f32 0.0, %v1341
        %1343 = vmatmul.bf16.gmra.mxu0 %v1318
        %v1344 = vpop.f32.mrf.mxu0
        %v1345 = vadd.f32 0.0, %v1344
        %v1346 = vpop.f32.mrf.mxu0
        %v1347 = vadd.f32 0.0, %v1346
        %1348 = vdwg.mxu0
        %1349 = vmatpush.bf16.msra.mxu0 0
        %1350 = vmatpush.bf16.msra.mxu0 %v1293
        %1351 = vmatpush.bf16.msra.mxu0 %v1291
        %1352 = vmatpush.bf16.msra.mxu0 %v1289
        %1353 = vmatpush.bf16.msra.mxu0 %v1287
        %1354 = vmatpush.bf16.msra.mxu0 %v1285
        %1355 = vmatpush.bf16.msra.mxu0 %v1283
        %1356 = vmatpush.bf16.msra.mxu0 %v1281
        %1357 = vmatmul.bf16.gmra.mxu0 %v1309
        %v1358 = vpop.f32.mrf.mxu0
        %v1359 = vadd.f32 0.0, %v1358
        %v1360 = vpop.f32.mrf.mxu0
        %v1361 = vadd.f32 0.0, %v1360
        %1362 = vmatmul.bf16.gmra.mxu0 %v1312
        %v1363 = vpop.f32.mrf.mxu0
        %v1364 = vadd.f32 0.0, %v1363
        %v1365 = vpop.f32.mrf.mxu0
        %v1366 = vadd.f32 0.0, %v1365
        %1367 = vmatmul.bf16.gmra.mxu0 %v1315
        %v1368 = vpop.f32.mrf.mxu0
        %v1369 = vadd.f32 0.0, %v1368
        %v1370 = vpop.f32.mrf.mxu0
        %v1371 = vadd.f32 0.0, %v1370
        %1372 = vmatmul.bf16.gmra.mxu0 %v1318
        %v1373 = vpop.f32.mrf.mxu0
        %v1374 = vadd.f32 0.0, %v1373
        %v1375 = vpop.f32.mrf.mxu0
        %v1376 = vadd.f32 0.0, %v1375
        %1377 = vdwg.mxu0
        %v1378 = vadd.f32 %v1164, %v1330
        %v1379 = vadd.f32 %v1193, %v1359
        %v1380 = vadd.f32 %v1166, %v1332
        %v1381 = vadd.f32 %v1195, %v1361
        %v1382 = vadd.f32 %v1169, %v1335
        %v1383 = vadd.f32 %v1198, %v1364
        %v1384 = vadd.f32 %v1171, %v1337
        %v1385 = vadd.f32 %v1200, %v1366
        %v1386 = vadd.f32 %v1174, %v1340
        %v1387 = vadd.f32 %v1203, %v1369
        %v1388 = vadd.f32 %v1176, %v1342
        %v1389 = vadd.f32 %v1205, %v1371
        %v1390 = vadd.f32 %v1179, %v1345
        %v1391 = vadd.f32 %v1208, %v1374
        %v1392 = vadd.f32 %v1181, %v1347
        %v1393 = vadd.f32 %v1210, %v1376
        %v1394 = vmax.f32 %v1378, 0.0
        %v1395 = vmax.f32 %v1379, 0.0
        %v1396 = vmax.f32 %v1380, 0.0
        %v1397 = vmax.f32 %v1381, 0.0
        %v1398 = vmax.f32 %v1382, 0.0
        %v1399 = vmax.f32 %v1383, 0.0
        %v1400 = vmax.f32 %v1384, 0.0
        %v1401 = vmax.f32 %v1385, 0.0
        %v1402 = vmax.f32 %v1386, 0.0
        %v1403 = vmax.f32 %v1387, 0.0
        %v1404 = vmax.f32 %v1388, 0.0
        %v1405 = vmax.f32 %v1389, 0.0
        %v1406 = vmax.f32 %v1390, 0.0
        %v1407 = vmax.f32 %v1391, 0.0
        %v1408 = vmax.f32 %v1392, 0.0
        %v1409 = vmax.f32 %v1393, 0.0
        %v1410 = vld [vmem:[%s5] sm:$0x3]
        %v1412 = vperm.slane %v1410, 0
        %v1413 = vperm.slane %v1410, 1
        %v1416 = vmul.f32 %v1394, %v1412
        %v1417 = vmul.f32 %v1395, %v1413
        %v1418 = vmul.f32 %v1396, %v1412
        %v1419 = vmul.f32 %v1397, %v1413
        %v1420 = vmul.f32 %v1398, %v1412
        %v1421 = vmul.f32 %v1399, %v1413
        %v1422 = vmul.f32 %v1400, %v1412
        %v1423 = vmul.f32 %v1401, %v1413
        %v1424 = vmul.f32 %v1402, %v1412
        %v1425 = vmul.f32 %v1403, %v1413
        %v1426 = vmul.f32 %v1404, %v1412
        %v1427 = vmul.f32 %v1405, %v1413
        %v1428 = vmul.f32 %v1406, %v1412
        %v1429 = vmul.f32 %v1407, %v1413
        %v1430 = vmul.f32 %v1408, %v1412
        %v1431 = vmul.f32 %v1409, %v1413
        %v1432 = vld [vmem:[%s6] sm:$0x3]
        %v1434 = vperm.slane %v1432, 0
        %v1435 = vperm.slane %v1432, 1
        %v1438 = vadd.f32 %v1416, %v1434
        %v1439 = vadd.f32 %v1417, %v1435
        %v1440 = vadd.f32 %v1418, %v1434
        %v1441 = vadd.f32 %v1419, %v1435
        %v1442 = vadd.f32 %v1420, %v1434
        %v1443 = vadd.f32 %v1421, %v1435
        %v1444 = vadd.f32 %v1422, %v1434
        %v1445 = vadd.f32 %v1423, %v1435
        %v1446 = vadd.f32 %v1424, %v1434
        %v1447 = vadd.f32 %v1425, %v1435
        %v1448 = vadd.f32 %v1426, %v1434
        %v1449 = vadd.f32 %v1427, %v1435
        %v1450 = vadd.f32 %v1428, %v1434
        %v1451 = vadd.f32 %v1429, %v1435
        %v1452 = vadd.f32 %v1430, %v1434
        %v1453 = vadd.f32 %v1431, %v1435
        %v1454 = vpack.c.bf16 %v1440, %v1438
        %v1455 = vpack.c.bf16 %v1441, %v1439
        %v1456 = vpack.c.bf16 %v1444, %v1442
        %v1457 = vpack.c.bf16 %v1445, %v1443
        %v1458 = vpack.c.bf16 %v1448, %v1446
        %v1459 = vpack.c.bf16 %v1449, %v1447
        %v1460 = vpack.c.bf16 %v1452, %v1450
        %v1461 = vpack.c.bf16 %v1453, %v1451
        %v1462 = vld [vmem:[%s7] sm:$0xf]
        %v1463 = vld [vmem:[%s7 + $0x4] sm:$0xf]
        %v1464 = vld [vmem:[%s7 + $0x8] sm:$0xf]
        %v1465 = vld [vmem:[%s7 + $0xc] sm:$0xf]
        %v1466 = vld [vmem:[%s7 + $0x10] sm:$0xf]
        %v1467 = vld [vmem:[%s7 + $0x14] sm:$0xf]
        %v1468 = vld [vmem:[%s7 + $0x18] sm:$0xf]
        %v1469 = vld [vmem:[%s7 + $0x1c] sm:$0xf]
        %v1470 = vld [vmem:[%s7 + $0x20] sm:$0xf]
        %v1471 = vld [vmem:[%s7 + $0x24] sm:$0xf]
        %v1472 = vld [vmem:[%s7 + $0x28] sm:$0xf]
        %v1473 = vld [vmem:[%s7 + $0x2c] sm:$0xf]
        %v1474 = vld [vmem:[%s7 + $0x30] sm:$0xf]
        %v1475 = vld [vmem:[%s7 + $0x34] sm:$0xf]
        %v1476 = vld [vmem:[%s7 + $0x38] sm:$0xf]
        %v1477 = vld [vmem:[%s7 + $0x3c] sm:$0xf]
        %v1478 = vld [vmem:[%s7 + $0x40] sm:$0xf]
        %v1479 = vld [vmem:[%s7 + $0x44] sm:$0xf]
        %v1480 = vld [vmem:[%s7 + $0x48] sm:$0xf]
        %v1481 = vld [vmem:[%s7 + $0x4c] sm:$0xf]
        %v1482 = vld [vmem:[%s7 + $0x50] sm:$0xf]
        %v1483 = vld [vmem:[%s7 + $0x54] sm:$0xf]
        %v1484 = vld [vmem:[%s7 + $0x58] sm:$0xf]
        %v1485 = vld [vmem:[%s7 + $0x5c] sm:$0xf]
        %v1510 = vunpack.c.l.b16 %v1462
        %v1511 = vunpack.c.l.b16 %v1463
        %v1512 = vunpack.c.l.b16 %v1464
        %v1513 = vunpack.c.l.b16 %v1465
        %v1514 = vunpack.c.l.b16 %v1466
        %v1515 = vunpack.c.l.b16 %v1467
        %v1516 = vunpack.c.l.b16 %v1468
        %v1517 = vunpack.c.l.b16 %v1469
        %v1518 = vunpack.c.l.b16 %v1470
        %v1519 = vunpack.c.l.b16 %v1471
        %v1520 = vunpack.c.l.b16 %v1472
        %v1521 = vunpack.c.l.b16 %v1473
        %v1522 = vunpack.c.l.b16 %v1474
        %v1523 = vunpack.c.l.b16 %v1475
        %v1524 = vunpack.c.l.b16 %v1476
        %v1525 = vunpack.c.l.b16 %v1477
        %v1526 = vunpack.c.l.b16 %v1478
        %v1527 = vunpack.c.l.b16 %v1479
        %v1528 = vunpack.c.l.b16 %v1480
        %v1529 = vunpack.c.l.b16 %v1481
        %v1530 = vunpack.c.l.b16 %v1482
        %v1531 = vunpack.c.l.b16 %v1483
        %v1532 = vunpack.c.l.b16 %v1484
        %v1533 = vunpack.c.l.b16 %v1485
        %v1534 = vpack.c.b16 %v1511, %v1510
        %v1535 = vpack.c.b16 %v1513, %v1512
        %v1536 = vpack.c.b16 %v1515, %v1514
        %v1537 = vpack.c.b16 %v1517, %v1516
        %v1538 = vpack.c.b16 %v1519, %v1518
        %v1539 = vpack.c.b16 %v1521, %v1520
        %v1540 = vpack.c.b16 %v1523, %v1522
        %v1541 = vpack.c.b16 %v1525, %v1524
        %v1542 = vpack.c.b16 %v1527, %v1526
        %v1543 = vpack.c.b16 %v1529, %v1528
        %v1544 = vpack.c.b16 %v1531, %v1530
        %v1545 = vpack.c.b16 %v1533, %v1532
        %vm1558 = vcmask 523264
        %v1560 = vsel %vm1558, %v1455, 0
        %v1563 = vsel %vm1558, %v1457, 0
        %v1566 = vsel %vm1558, %v1459, 0
        %v1569 = vsel %vm1558, %v1461, 0
        %1571 = vmatpush.bf16.msra.mxu0 %v1541
        %1572 = vmatpush.bf16.msra.mxu0 %v1540
        %1573 = vmatpush.bf16.msra.mxu0 %v1539
        %1574 = vmatpush.bf16.msra.mxu0 %v1538
        %1575 = vmatpush.bf16.msra.mxu0 %v1537
        %1576 = vmatpush.bf16.msra.mxu0 %v1536
        %1577 = vmatpush.bf16.msra.mxu0 %v1535
        %1578 = vmatpush.bf16.msra.mxu0 %v1534
        %1579 = vmatmul.bf16.gmra.mxu0 %v1454
        %v1580 = vpop.f32.mrf.mxu0
        %v1581 = vadd.f32 0.0, %v1580
        %v1582 = vpop.f32.mrf.mxu0
        %v1583 = vadd.f32 0.0, %v1582
        %1584 = vmatmul.bf16.gmra.mxu0 %v1456
        %v1585 = vpop.f32.mrf.mxu0
        %v1586 = vadd.f32 0.0, %v1585
        %v1587 = vpop.f32.mrf.mxu0
        %v1588 = vadd.f32 0.0, %v1587
        %1589 = vmatmul.bf16.gmra.mxu0 %v1458
        %v1590 = vpop.f32.mrf.mxu0
        %v1591 = vadd.f32 0.0, %v1590
        %v1592 = vpop.f32.mrf.mxu0
        %v1593 = vadd.f32 0.0, %v1592
        %1594 = vmatmul.bf16.gmra.mxu0 %v1460
        %v1595 = vpop.f32.mrf.mxu0
        %v1596 = vadd.f32 0.0, %v1595
        %v1597 = vpop.f32.mrf.mxu0
        %v1598 = vadd.f32 0.0, %v1597
        %1599 = vdwg.mxu0
        %1600 = vmatpush.bf16.msra.mxu0 0
        %1601 = vmatpush.bf16.msra.mxu0 0
        %1602 = vmatpush.bf16.msra.mxu0 0
        %1603 = vmatpush.bf16.msra.mxu0 0
        %1604 = vmatpush.bf16.msra.mxu0 %v1545
        %1605 = vmatpush.bf16.msra.mxu0 %v1544
        %1606 = vmatpush.bf16.msra.mxu0 %v1543
        %1607 = vmatpush.bf16.msra.mxu0 %v1542
        %1608 = vmatmul.bf16.gmra.mxu0 %v1560
        %v1609 = vpop.f32.mrf.mxu0
        %v1610 = vadd.f32 %v1581, %v1609
        %v1611 = vpop.f32.mrf.mxu0
        %v1612 = vadd.f32 %v1583, %v1611
        %1613 = vmatmul.bf16.gmra.mxu0 %v1563
        %v1614 = vpop.f32.mrf.mxu0
        %v1615 = vadd.f32 %v1586, %v1614
        %v1616 = vpop.f32.mrf.mxu0
        %v1617 = vadd.f32 %v1588, %v1616
        %1618 = vmatmul.bf16.gmra.mxu0 %v1566
        %v1619 = vpop.f32.mrf.mxu0
        %v1620 = vadd.f32 %v1591, %v1619
        %v1621 = vpop.f32.mrf.mxu0
        %v1622 = vadd.f32 %v1593, %v1621
        %1623 = vmatmul.bf16.gmra.mxu0 %v1569
        %v1624 = vpop.f32.mrf.mxu0
        %v1625 = vadd.f32 %v1596, %v1624
        %v1626 = vpop.f32.mrf.mxu0
        %v1627 = vadd.f32 %v1598, %v1626
        %1628 = vdwg.mxu0
        %v1629 = vpack.c.bf16 %v1612, %v1610
        %v1630 = vpack.c.bf16 %v1617, %v1615
        %v1631 = vpack.c.bf16 %v1622, %v1620
        %v1632 = vpack.c.bf16 %v1627, %v1625
        %v1633 = vld [vmem:[%s8] sm:$0xf]
        %v1634 = vld [vmem:[%s8 + $0x4] sm:$0xf]
        %v1635 = vld [vmem:[%s8 + $0x8] sm:$0xf]
        %v1639 = vunpack.c.l.b16 %v1633
        %v1640 = vunpack.c.l.b16 %v1634
        %v1641 = vunpack.c.l.b16 %v1635
        %v1642 = vpack.c.b16 %v1640, %v1639
        %v1643 = vpack.c.b16 %v1641, %v1641
        %vm1644 = vcmask 490496
        %v1646 = vsel %vm1644, %v1642, 0
        %v1649 = vsel %vm1644, %v1643, 0
        %vm1651 = vcmask 1045504
        %v1653 = vsel %vm1651, %v1632, 0
        %1655 = vmatpush.bf16.msra.mxu0 0
        %1656 = vmatpush.bf16.msra.mxu0 0
        %1657 = vmatpush.bf16.msra.mxu0 0
        %1658 = vmatpush.bf16.msra.mxu0 0
        %1659 = vmatpush.bf16.msra.mxu0 %v1653
        %1660 = vmatpush.bf16.msra.mxu0 %v1631
        %1661 = vmatpush.bf16.msra.mxu0 %v1630
        %1662 = vmatpush.bf16.msra.mxu0 %v1629
        %1663 = vmatmul.bf16.gmra.mxu0 %v1646
        %v1664 = vpop.f32.mrf.mxu0
        %v1665 = vadd.f32 0.0, %v1664
        %v1666 = vpop.f32.mrf.mxu0
        %v1667 = vadd.f32 0.0, %v1666
        %1668 = vmatmul.bf16.gmra.mxu0 %v1649
        %v1669 = vpop.f32.mrf.mxu0
        %v1670 = vadd.f32 0.0, %v1669
        %v1671 = vpop.f32.mrf.mxu0
        %1672 = vdwg.mxu0
        %v1673 = vld [vmem:[%s9] sm:$0xf]
        %v1674 = vld [vmem:[%s9 + $0x4] sm:$0xf]
        %v1675 = vld [vmem:[%s9 + $0x8] sm:$0xf]
        %v1679 = vunpack.c.l.b16 %v1673
        %v1680 = vunpack.c.l.b16 %v1674
        %v1681 = vunpack.c.l.b16 %v1675
        %v1682 = vpack.c.b16 %v1680, %v1679
        %v1683 = vpack.c.b16 %v1681, %v1681
        %v1685 = vsel %vm1644, %v1682, 0
        %v1688 = vsel %vm1644, %v1683, 0
        %1690 = vmatpush.bf16.msra.mxu0 0
        %1691 = vmatpush.bf16.msra.mxu0 0
        %1692 = vmatpush.bf16.msra.mxu0 0
        %1693 = vmatpush.bf16.msra.mxu0 0
        %1694 = vmatpush.bf16.msra.mxu0 %v1653
        %1695 = vmatpush.bf16.msra.mxu0 %v1631
        %1696 = vmatpush.bf16.msra.mxu0 %v1630
        %1697 = vmatpush.bf16.msra.mxu0 %v1629
        %1698 = vmatmul.bf16.gmra.mxu0 %v1685
        %v1699 = vpop.f32.mrf.mxu0
        %v1700 = vadd.f32 0.0, %v1699
        %v1701 = vpop.f32.mrf.mxu0
        %v1702 = vadd.f32 0.0, %v1701
        %1703 = vmatmul.bf16.gmra.mxu0 %v1688
        %v1704 = vpop.f32.mrf.mxu0
        %v1705 = vadd.f32 0.0, %v1704
        %v1706 = vpop.f32.mrf.mxu0
        %1707 = vdwg.mxu0
        %v1708 = vmax.f32 %v1665, %v1700
        %v1709 = vmax.f32 %v1667, %v1702
        %v1710 = vmax.f32 %v1670, %v1705
        %v1711 = vpack.c.bf16 %v1709, %v1708
        %v1712 = vpack.c.bf16 %v1710, %v1710
        %v1713 = vld [vmem:[%s10] sm:$0xf]
        %v1714 = vld [vmem:[%s10 + $0x4] sm:$0xf]
        %v1715 = vld [vmem:[%s10 + $0x8] sm:$0xf]
        %v1716 = vld [vmem:[%s10 + $0xc] sm:$0xf]
        %v1717 = vld [vmem:[%s10 + $0x10] sm:$0xf]
        %v1718 = vld [vmem:[%s10 + $0x14] sm:$0xf]
        %v1719 = vld [vmem:[%s10 + $0x18] sm:$0xf]
        %v1720 = vld [vmem:[%s10 + $0x1c] sm:$0xf]
        %v1721 = vld [vmem:[%s10 + $0x20] sm:$0xf]
        %v1722 = vld [vmem:[%s10 + $0x24] sm:$0xf]
        %v1723 = vld [vmem:[%s10 + $0x28] sm:$0xf]
        %v1724 = vld [vmem:[%s10 + $0x2c] sm:$0xf]
        %v1725 = vld [vmem:[%s10 + $0x30] sm:$0xf]
        %v1726 = vld [vmem:[%s10 + $0x34] sm:$0xf]
        %v1727 = vld [vmem:[%s10 + $0x38] sm:$0xf]
        %v1743 = vunpack.c.l.b16 %v1713
        %v1744 = vunpack.c.l.b16 %v1714
        %v1745 = vunpack.c.l.b16 %v1715
        %v1746 = vunpack.c.l.b16 %v1716
        %v1747 = vunpack.c.l.b16 %v1717
        %v1748 = vunpack.c.l.b16 %v1718
        %v1749 = vunpack.c.l.b16 %v1719
        %v1750 = vunpack.c.l.b16 %v1720
        %v1751 = vunpack.c.l.b16 %v1721
        %v1752 = vunpack.c.l.b16 %v1722
        %v1753 = vunpack.c.l.b16 %v1723
        %v1754 = vunpack.c.l.b16 %v1724
        %v1755 = vunpack.c.l.b16 %v1725
        %v1756 = vunpack.c.l.b16 %v1726
        %v1757 = vunpack.c.l.b16 %v1727
        %v1758 = vpack.c.b16 %v1744, %v1743
        %v1759 = vpack.c.b16 %v1746, %v1745
        %v1760 = vpack.c.b16 %v1748, %v1747
        %v1761 = vpack.c.b16 %v1750, %v1749
        %v1762 = vpack.c.b16 %v1752, %v1751
        %v1763 = vpack.c.b16 %v1754, %v1753
        %v1764 = vpack.c.b16 %v1756, %v1755
        %v1765 = vpack.c.b16 %v1757, %v1757
        %vm1773 = vcmask 982016
        %v1775 = vsel %vm1773, %v1711, 0
        %v1778 = vsel %vm1773, %v1712, 0
        %vm1780 = vcmask 1043456
        %v1782 = vsel %vm1780, %v1765, 0
        %1784 = vmatpush.bf16.msra.mxu0 %v1782
        %1785 = vmatpush.bf16.msra.mxu0 %v1764
        %1786 = vmatpush.bf16.msra.mxu0 %v1763
        %1787 = vmatpush.bf16.msra.mxu0 %v1762
        %1788 = vmatpush.bf16.msra.mxu0 %v1761
        %1789 = vmatpush.bf16.msra.mxu0 %v1760
        %1790 = vmatpush.bf16.msra.mxu0 %v1759
        %1791 = vmatpush.bf16.msra.mxu0 %v1758
        %1792 = vmatmul.bf16.gmra.mxu0 %v1775
        %v1793 = vpop.f32.mrf.mxu0
        %v1794 = vadd.f32 0.0, %v1793
        %v1795 = vpop.f32.mrf.mxu0
        %v1796 = vadd.f32 0.0, %v1795
        %1797 = vmatmul.bf16.gmra.mxu0 %v1778
        %v1798 = vpop.f32.mrf.mxu0
        %v1799 = vadd.f32 0.0, %v1798
        %v1800 = vpop.f32.mrf.mxu0
        %1801 = vdwg.mxu0
        %v1802 = vld [vmem:[%s11] sm:$0xf]
        %v1803 = vld [vmem:[%s11 + $0x4] sm:$0xf]
        %v1804 = vld [vmem:[%s11 + $0x8] sm:$0xf]
        %v1805 = vld [vmem:[%s11 + $0xc] sm:$0xf]
        %v1806 = vld [vmem:[%s11 + $0x10] sm:$0xf]
        %v1807 = vld [vmem:[%s11 + $0x14] sm:$0xf]
        %v1808 = vld [vmem:[%s11 + $0x18] sm:$0xf]
        %v1809 = vld [vmem:[%s11 + $0x1c] sm:$0xf]
        %v1810 = vld [vmem:[%s11 + $0x20] sm:$0xf]
        %v1811 = vld [vmem:[%s11 + $0x24] sm:$0xf]
        %v1812 = vld [vmem:[%s11 + $0x28] sm:$0xf]
        %v1813 = vld [vmem:[%s11 + $0x2c] sm:$0xf]
        %v1814 = vld [vmem:[%s11 + $0x30] sm:$0xf]
        %v1815 = vld [vmem:[%s11 + $0x34] sm:$0xf]
        %v1816 = vld [vmem:[%s11 + $0x38] sm:$0xf]
        %v1832 = vunpack.c.l.b16 %v1802
        %v1833 = vunpack.c.l.b16 %v1803
        %v1834 = vunpack.c.l.b16 %v1804
        %v1835 = vunpack.c.l.b16 %v1805
        %v1836 = vunpack.c.l.b16 %v1806
        %v1837 = vunpack.c.l.b16 %v1807
        %v1838 = vunpack.c.l.b16 %v1808
        %v1839 = vunpack.c.l.b16 %v1809
        %v1840 = vunpack.c.l.b16 %v1810
        %v1841 = vunpack.c.l.b16 %v1811
        %v1842 = vunpack.c.l.b16 %v1812
        %v1843 = vunpack.c.l.b16 %v1813
        %v1844 = vunpack.c.l.b16 %v1814
        %v1845 = vunpack.c.l.b16 %v1815
        %v1846 = vunpack.c.l.b16 %v1816
        %v1847 = vpack.c.b16 %v1833, %v1832
        %v1848 = vpack.c.b16 %v1835, %v1834
        %v1849 = vpack.c.b16 %v1837, %v1836
        %v1850 = vpack.c.b16 %v1839, %v1838
        %v1851 = vpack.c.b16 %v1841, %v1840
        %v1852 = vpack.c.b16 %v1843, %v1842
        %v1853 = vpack.c.b16 %v1845, %v1844
        %v1854 = vpack.c.b16 %v1846, %v1846
        %v1863 = vsel %vm1780, %v1854, 0
        %1865 = vmatpush.bf16.msra.mxu0 %v1863
        %1866 = vmatpush.bf16.msra.mxu0 %v1853
        %1867 = vmatpush.bf16.msra.mxu0 %v1852
        %1868 = vmatpush.bf16.msra.mxu0 %v1851
        %1869 = vmatpush.bf16.msra.mxu0 %v1850
        %1870 = vmatpush.bf16.msra.mxu0 %v1849
        %1871 = vmatpush.bf16.msra.mxu0 %v1848
        %1872 = vmatpush.bf16.msra.mxu0 %v1847
        %1873 = vmatmul.bf16.gmra.mxu0 %v1775
        %v1874 = vpop.f32.mrf.mxu0
        %v1875 = vadd.f32 0.0, %v1874
        %v1876 = vpop.f32.mrf.mxu0
        %v1877 = vadd.f32 0.0, %v1876
        %1878 = vmatmul.bf16.gmra.mxu0 %v1778
        %v1879 = vpop.f32.mrf.mxu0
        %v1880 = vadd.f32 0.0, %v1879
        %v1881 = vpop.f32.mrf.mxu0
        %1882 = vdwg.mxu0
        %v1883 = vmax.f32 %v1794, %v1875
        %v1884 = vmax.f32 %v1796, %v1877
        %v1885 = vmax.f32 %v1799, %v1880
        %v1886 = vpack.c.bf16 %v1884, %v1883
        %v1887 = vpack.c.bf16 %v1885, %v1885
        %v1888 = vld [vmem:[%s12] sm:$0xf]
        %v1889 = vld [vmem:[%s12 + $0x4] sm:$0xf]
        %v1890 = vld [vmem:[%s12 + $0x8] sm:$0xf]
        %v1891 = vld [vmem:[%s12 + $0xc] sm:$0xf]
        %v1892 = vld [vmem:[%s12 + $0x10] sm:$0xf]
        %v1893 = vld [vmem:[%s12 + $0x14] sm:$0xf]
        %v1894 = vld [vmem:[%s12 + $0x18] sm:$0xf]
        %v1895 = vld [vmem:[%s12 + $0x1c] sm:$0x3]
        %s1896 = scalar_lea.vmem %s12, 32
        %v1897 = vld [vmem:[%s1896] sm:$0xf]
        %v1898 = vld [vmem:[%s1896 + $0x4] sm:$0xf]
        %v1899 = vld [vmem:[%s1896 + $0x8] sm:$0xf]
        %v1900 = vld [vmem:[%s1896 + $0xc] sm:$0xf]
        %v1901 = vld [vmem:[%s1896 + $0x10] sm:$0xf]
        %v1902 = vld [vmem:[%s1896 + $0x14] sm:$0xf]
        %v1903 = vld [vmem:[%s1896 + $0x18] sm:$0xf]
        %v1904 = vld [vmem:[%s1896 + $0x1c] sm:$0x3]
        %v1906 = vshrl.u32 %v1886, 16
        %v1908 = vshll.u32 %v1886, 16
        %v1910 = vrot.slane %v1908, 1
        %v1911 = vor.u32 %v1906, %v1910
        %v1913 = vshll.u32 %v1887, 16
        %v1915 = vrot.slane %v1913, 1
        %v1916 = vsel %vm646, %v1911, %v1915
        %v1917 = vshrl.u32 %v1887, 16
        %v1919 = vor.u32 %v1917, %v1915
        %v1928 = vunpack.c.l.b16 %v1897
        %v1929 = vunpack.c.l.b16 %v1898
        %v1930 = vunpack.c.l.b16 %v1899
        %v1931 = vunpack.c.l.b16 %v1900
        %v1932 = vunpack.c.l.b16 %v1901
        %v1933 = vunpack.c.l.b16 %v1902
        %v1934 = vunpack.c.l.b16 %v1903
        %v1935 = vunpack.c.l.b16 %v1904
        %v1936 = vpack.c.b16 %v1929, %v1928
        %v1937 = vpack.c.b16 %v1931, %v1930
        %v1938 = vpack.c.b16 %v1933, %v1932
        %v1939 = vpack.c.b16 %v1935, %v1934
        %v1944 = vsel %vm1644, %v1916, 0
        %v1947 = vsel %vm1644, %v1919, 0
        %v1950 = vsel %vm1651, %v1939, 0
        %1952 = vmatpush.bf16.msra.mxu0 0
        %1953 = vmatpush.bf16.msra.mxu0 0
        %1954 = vmatpush.bf16.msra.mxu0 0
        %1955 = vmatpush.bf16.msra.mxu0 0
        %1956 = vmatpush.bf16.msra.mxu0 %v1950
        %1957 = vmatpush.bf16.msra.mxu0 %v1938
        %1958 = vmatpush.bf16.msra.mxu0 %v1937
        %1959 = vmatpush.bf16.msra.mxu0 %v1936
        %1960 = vmatmul.bf16.gmra.mxu0 %v1944
        %v1961 = vpop.f32.mrf.mxu0
        %v1962 = vadd.f32 0.0, %v1961
        %v1963 = vpop.f32.mrf.mxu0
        %v1964 = vadd.f32 0.0, %v1963
        %1965 = vmatmul.bf16.gmra.mxu0 %v1947
        %v1966 = vpop.f32.mrf.mxu0
        %v1967 = vadd.f32 0.0, %v1966
        %v1968 = vpop.f32.mrf.mxu0
        %1969 = vdwg.mxu0
        %v1978 = vunpack.c.l.b16 %v1888
        %v1979 = vunpack.c.l.b16 %v1889
        %v1980 = vunpack.c.l.b16 %v1890
        %v1981 = vunpack.c.l.b16 %v1891
        %v1982 = vunpack.c.l.b16 %v1892
        %v1983 = vunpack.c.l.b16 %v1893
        %v1984 = vunpack.c.l.b16 %v1894
        %v1985 = vunpack.c.l.b16 %v1895
        %v1986 = vpack.c.b16 %v1979, %v1978
        %v1987 = vpack.c.b16 %v1981, %v1980
        %v1988 = vpack.c.b16 %v1983, %v1982
        %v1989 = vpack.c.b16 %v1985, %v1984
        %v1993 = vsel %vm1644, %v1886, 0
        %v1995 = vsel %vm1644, %v1887, 0
        %v1998 = vsel %vm1651, %v1989, 0
        %2000 = vmatpush.bf16.msra.mxu0 0
        %2001 = vmatpush.bf16.msra.mxu0 0
        %2002 = vmatpush.bf16.msra.mxu0 0
        %2003 = vmatpush.bf16.msra.mxu0 0
        %2004 = vmatpush.bf16.msra.mxu0 %v1998
        %2005 = vmatpush.bf16.msra.mxu0 %v1988
        %2006 = vmatpush.bf16.msra.mxu0 %v1987
        %2007 = vmatpush.bf16.msra.mxu0 %v1986
        %2008 = vmatmul.bf16.gmra.mxu0 %v1993
        %v2009 = vpop.f32.mrf.mxu0
        %v2010 = vadd.f32 %v1962, %v2009
        %v2011 = vpop.f32.mrf.mxu0
        %v2012 = vadd.f32 %v1964, %v2011
        %2013 = vmatmul.bf16.gmra.mxu0 %v1995
        %v2014 = vpop.f32.mrf.mxu0
        %v2015 = vadd.f32 %v1967, %v2014
        %v2016 = vpop.f32.mrf.mxu0
        %2017 = vdwg.mxu0
        %s2018 = scalar_lea.vmem %s12, 64
        %v2019 = vld [vmem:[%s2018] sm:$0xf]
        %v2020 = vld [vmem:[%s2018 + $0x4] sm:$0xf]
        %v2021 = vld [vmem:[%s2018 + $0x8] sm:$0xf]
        %v2022 = vld [vmem:[%s2018 + $0xc] sm:$0xf]
        %v2023 = vld [vmem:[%s2018 + $0x10] sm:$0xf]
        %v2024 = vld [vmem:[%s2018 + $0x14] sm:$0xf]
        %v2025 = vld [vmem:[%s2018 + $0x18] sm:$0xf]
        %v2026 = vld [vmem:[%s2018 + $0x1c] sm:$0x3]
        %v2029 = vrot.slane %v1886, 1
        %v2030 = vrot.slane %v1887, 1
        %v2031 = vsel %vm776, %v2029, %v2030
        %v2040 = vunpack.c.l.b16 %v2019
        %v2041 = vunpack.c.l.b16 %v2020
        %v2042 = vunpack.c.l.b16 %v2021
        %v2043 = vunpack.c.l.b16 %v2022
        %v2044 = vunpack.c.l.b16 %v2023
        %v2045 = vunpack.c.l.b16 %v2024
        %v2046 = vunpack.c.l.b16 %v2025
        %v2047 = vunpack.c.l.b16 %v2026
        %v2048 = vpack.c.b16 %v2041, %v2040
        %v2049 = vpack.c.b16 %v2043, %v2042
        %v2050 = vpack.c.b16 %v2045, %v2044
        %v2051 = vpack.c.b16 %v2047, %v2046
        %v2056 = vsel %vm1644, %v2031, 0
        %v2059 = vsel %vm1644, %v2030, 0
        %v2062 = vsel %vm1651, %v2051, 0
        %2064 = vmatpush.bf16.msra.mxu0 0
        %2065 = vmatpush.bf16.msra.mxu0 0
        %2066 = vmatpush.bf16.msra.mxu0 0
        %2067 = vmatpush.bf16.msra.mxu0 0
        %2068 = vmatpush.bf16.msra.mxu0 %v2062
        %2069 = vmatpush.bf16.msra.mxu0 %v2050
        %2070 = vmatpush.bf16.msra.mxu0 %v2049
        %2071 = vmatpush.bf16.msra.mxu0 %v2048
        %2072 = vmatmul.bf16.gmra.mxu0 %v2056
        %v2073 = vpop.f32.mrf.mxu0
        %v2074 = vadd.f32 0.0, %v2073
        %v2075 = vpop.f32.mrf.mxu0
        %v2076 = vadd.f32 0.0, %v2075
        %2077 = vmatmul.bf16.gmra.mxu0 %v2059
        %v2078 = vpop.f32.mrf.mxu0
        %v2079 = vadd.f32 0.0, %v2078
        %v2080 = vpop.f32.mrf.mxu0
        %2081 = vdwg.mxu0
        %v2082 = vadd.f32 %v2010, %v2074
        %v2083 = vadd.f32 %v2012, %v2076
        %v2084 = vadd.f32 %v2015, %v2079
        %v2085 = vmax.f32 %v2082, 0.0
        %v2086 = vmax.f32 %v2083, 0.0
        %v2087 = vmax.f32 %v2084, 0.0
        %v2088 = vld [vmem:[%s13] sm:$0x1]
        %v2090 = vperm.slane %v2088, 0
        %v2092 = vmul.f32 %v2085, %v2090
        %v2093 = vmul.f32 %v2086, %v2090
        %v2094 = vmul.f32 %v2087, %v2090
        %v2095 = vld [vmem:[%s14] sm:$0x1]
        %v2097 = vperm.slane %v2095, 0
        %v2099 = vadd.f32 %v2092, %v2097
        %v2100 = vadd.f32 %v2093, %v2097
        %v2101 = vadd.f32 %v2094, %v2097
        %v2102 = vpack.c.bf16 %v2100, %v2099
        %v2103 = vpack.c.bf16 %v2101, %v2101
        %v2104 = vld [vmem:[%s15] sm:$0xf]
        %v2105 = vld [vmem:[%s15 + $0x4] sm:$0xf]
        %v2106 = vld [vmem:[%s15 + $0x8] sm:$0xf]
        %v2107 = vld [vmem:[%s15 + $0xc] sm:$0xf]
        %v2108 = vld [vmem:[%s15 + $0x10] sm:$0xf]
        %v2109 = vld [vmem:[%s15 + $0x14] sm:$0xf]
        %v2110 = vld [vmem:[%s15 + $0x18] sm:$0xf]
        %v2111 = vld [vmem:[%s15 + $0x1c] sm:$0xf]
        %s2112 = scalar_lea.vmem %s15, 32
        %v2113 = vld [vmem:[%s2112] sm:$0xf]
        %v2114 = vld [vmem:[%s2112 + $0x4] sm:$0xf]
        %v2115 = vld [vmem:[%s2112 + $0x8] sm:$0xf]
        %v2116 = vld [vmem:[%s2112 + $0xc] sm:$0xf]
        %v2117 = vld [vmem:[%s2112 + $0x10] sm:$0xf]
        %v2118 = vld [vmem:[%s2112 + $0x14] sm:$0xf]
        %v2119 = vld [vmem:[%s2112 + $0x18] sm:$0xf]
        %v2120 = vld [vmem:[%s2112 + $0x1c] sm:$0xf]
        %v2122 = vshrl.u32 %v2102, 16
        %v2124 = vshll.u32 %v2102, 16
        %v2126 = vrot.slane %v2124, 1
        %v2127 = vor.u32 %v2122, %v2126
        %v2129 = vshll.u32 %v2103, 16
        %v2131 = vrot.slane %v2129, 1
        %v2132 = vsel %vm646, %v2127, %v2131
        %v2133 = vshrl.u32 %v2103, 16
        %v2135 = vor.u32 %v2133, %v2131
        %v2144 = vunpack.c.l.b16 %v2113
        %v2145 = vunpack.c.l.b16 %v2114
        %v2146 = vunpack.c.l.b16 %v2115
        %v2147 = vunpack.c.l.b16 %v2116
        %v2148 = vunpack.c.l.b16 %v2117
        %v2149 = vunpack.c.l.b16 %v2118
        %v2150 = vunpack.c.l.b16 %v2119
        %v2151 = vunpack.c.l.b16 %v2120
        %v2152 = vpack.c.b16 %v2145, %v2144
        %v2153 = vpack.c.b16 %v2147, %v2146
        %v2154 = vpack.c.b16 %v2149, %v2148
        %v2155 = vpack.c.b16 %v2151, %v2150
        %v2161 = vsel %vm1558, %v2132, 0
        %v2164 = vsel %vm1558, %v2135, 0
        %2166 = vmatpush.bf16.msra.mxu0 0
        %2167 = vmatpush.bf16.msra.mxu0 0
        %2168 = vmatpush.bf16.msra.mxu0 0
        %2169 = vmatpush.bf16.msra.mxu0 0
        %2170 = vmatpush.bf16.msra.mxu0 %v2155
        %2171 = vmatpush.bf16.msra.mxu0 %v2154
        %2172 = vmatpush.bf16.msra.mxu0 %v2153
        %2173 = vmatpush.bf16.msra.mxu0 %v2152
        %2174 = vmatmul.bf16.gmra.mxu0 %v2161
        %v2175 = vpop.f32.mrf.mxu0
        %v2176 = vadd.f32 0.0, %v2175
        %v2177 = vpop.f32.mrf.mxu0
        %v2178 = vadd.f32 0.0, %v2177
        %2179 = vmatmul.bf16.gmra.mxu0 %v2164
        %v2180 = vpop.f32.mrf.mxu0
        %v2181 = vadd.f32 0.0, %v2180
        %v2182 = vpop.f32.mrf.mxu0
        %2183 = vdwg.mxu0
        %v2192 = vunpack.c.l.b16 %v2104
        %v2193 = vunpack.c.l.b16 %v2105
        %v2194 = vunpack.c.l.b16 %v2106
        %v2195 = vunpack.c.l.b16 %v2107
        %v2196 = vunpack.c.l.b16 %v2108
        %v2197 = vunpack.c.l.b16 %v2109
        %v2198 = vunpack.c.l.b16 %v2110
        %v2199 = vunpack.c.l.b16 %v2111
        %v2200 = vpack.c.b16 %v2193, %v2192
        %v2201 = vpack.c.b16 %v2195, %v2194
        %v2202 = vpack.c.b16 %v2197, %v2196
        %v2203 = vpack.c.b16 %v2199, %v2198
        %v2208 = vsel %vm1558, %v2102, 0
        %v2210 = vsel %vm1558, %v2103, 0
        %2212 = vmatpush.bf16.msra.mxu0 0
        %2213 = vmatpush.bf16.msra.mxu0 0
        %2214 = vmatpush.bf16.msra.mxu0 0
        %2215 = vmatpush.bf16.msra.mxu0 0
        %2216 = vmatpush.bf16.msra.mxu0 %v2203
        %2217 = vmatpush.bf16.msra.mxu0 %v2202
        %2218 = vmatpush.bf16.msra.mxu0 %v2201
        %2219 = vmatpush.bf16.msra.mxu0 %v2200
        %2220 = vmatmul.bf16.gmra.mxu0 %v2208
        %v2221 = vpop.f32.mrf.mxu0
        %v2222 = vadd.f32 %v2176, %v2221
        %v2223 = vpop.f32.mrf.mxu0
        %v2224 = vadd.f32 %v2178, %v2223
        %2225 = vmatmul.bf16.gmra.mxu0 %v2210
        %v2226 = vpop.f32.mrf.mxu0
        %v2227 = vadd.f32 %v2181, %v2226
        %v2228 = vpop.f32.mrf.mxu0
        %2229 = vdwg.mxu0
        %s2230 = scalar_lea.vmem %s15, 64
        %v2231 = vld [vmem:[%s2230] sm:$0xf]
        %v2232 = vld [vmem:[%s2230 + $0x4] sm:$0xf]
        %v2233 = vld [vmem:[%s2230 + $0x8] sm:$0xf]
        %v2234 = vld [vmem:[%s2230 + $0xc] sm:$0xf]
        %v2235 = vld [vmem:[%s2230 + $0x10] sm:$0xf]
        %v2236 = vld [vmem:[%s2230 + $0x14] sm:$0xf]
        %v2237 = vld [vmem:[%s2230 + $0x18] sm:$0xf]
        %v2238 = vld [vmem:[%s2230 + $0x1c] sm:$0xf]
        %v2241 = vrot.slane %v2102, 1
        %v2242 = vrot.slane %v2103, 1
        %v2243 = vsel %vm776, %v2241, %v2242
        %v2252 = vunpack.c.l.b16 %v2231
        %v2253 = vunpack.c.l.b16 %v2232
        %v2254 = vunpack.c.l.b16 %v2233
        %v2255 = vunpack.c.l.b16 %v2234
        %v2256 = vunpack.c.l.b16 %v2235
        %v2257 = vunpack.c.l.b16 %v2236
        %v2258 = vunpack.c.l.b16 %v2237
        %v2259 = vunpack.c.l.b16 %v2238
        %v2260 = vpack.c.b16 %v2253, %v2252
        %v2261 = vpack.c.b16 %v2255, %v2254
        %v2262 = vpack.c.b16 %v2257, %v2256
        %v2263 = vpack.c.b16 %v2259, %v2258
        %v2269 = vsel %vm1558, %v2243, 0
        %v2272 = vsel %vm1558, %v2242, 0
        %2274 = vmatpush.bf16.msra.mxu0 0
        %2275 = vmatpush.bf16.msra.mxu0 0
        %2276 = vmatpush.bf16.msra.mxu0 0
        %2277 = vmatpush.bf16.msra.mxu0 0
        %2278 = vmatpush.bf16.msra.mxu0 %v2263
        %2279 = vmatpush.bf16.msra.mxu0 %v2262
        %2280 = vmatpush.bf16.msra.mxu0 %v2261
        %2281 = vmatpush.bf16.msra.mxu0 %v2260
        %2282 = vmatmul.bf16.gmra.mxu0 %v2269
        %v2283 = vpop.f32.mrf.mxu0
        %v2284 = vadd.f32 0.0, %v2283
        %v2285 = vpop.f32.mrf.mxu0
        %v2286 = vadd.f32 0.0, %v2285
        %2287 = vmatmul.bf16.gmra.mxu0 %v2272
        %v2288 = vpop.f32.mrf.mxu0
        %v2289 = vadd.f32 0.0, %v2288
        %v2290 = vpop.f32.mrf.mxu0
        %2291 = vdwg.mxu0
        %v2292 = vadd.f32 %v2222, %v2284
        %v2293 = vadd.f32 %v2224, %v2286
        %v2294 = vadd.f32 %v2227, %v2289
        %v2295 = vmax.f32 %v2292, 0.0
        %v2296 = vmax.f32 %v2293, 0.0
        %v2297 = vmax.f32 %v2294, 0.0
        %v2298 = vld [vmem:[%s16] sm:$0x1]
        %v2300 = vperm.slane %v2298, 0
        %v2302 = vmul.f32 %v2295, %v2300
        %v2303 = vmul.f32 %v2296, %v2300
        %v2304 = vmul.f32 %v2297, %v2300
        %v2305 = vld [vmem:[%s17] sm:$0x1]
        %v2307 = vperm.slane %v2305, 0
        %v2309 = vadd.f32 %v2302, %v2307
        %v2310 = vadd.f32 %v2303, %v2307
        %v2311 = vadd.f32 %v2304, %v2307
        %v2312 = vld [vmem:[%s18] sm:$0x3]
        %v2313 = vpack.c.bf16 %v2310, %v2309
        %v2314 = vpack.c.bf16 %v2311, %v2311
        %vm2315 = vcmask 162816
        %v2317 = vsel %vm2315, %v2312, 0
        %vm2319 = vcmask 1041408
        %v2321 = vsel %vm2319, %v2314, 0
        %2323 = vmatpush.bf16.msra.mxu0 0
        %2324 = vmatpush.bf16.msra.mxu0 0
        %2325 = vmatpush.bf16.msra.mxu0 0
        %2326 = vmatpush.bf16.msra.mxu0 0
        %2327 = vmatpush.bf16.msra.mxu0 0
        %2328 = vmatpush.bf16.msra.mxu0 0
        %2329 = vmatpush.bf16.msra.mxu0 %v2321
        %2330 = vmatpush.bf16.msra.mxu0 %v2313
        %2331 = vmatmul.bf16.gmra.mxu0 %v2317
        %v2332 = vpop.f32.mrf.mxu0
        %v2333 = vadd.f32 0.0, %v2332
        %v2334 = vpop.f32.mrf.mxu0
        %2335 = vdwg.mxu0
        %v2336 = vpack.c.bf16 %v2333, %v2333
        %v2337 = vld [vmem:[%s19] sm:$0xf]
        %v2338 = vld [vmem:[%s19 + $0x4] sm:$0xf]
        %v2339 = vld [vmem:[%s19 + $0x8] sm:$0xf]
        %v2340 = vld [vmem:[%s19 + $0xc] sm:$0xf]
        %v2345 = vunpack.c.l.b16 %v2337
        %v2346 = vunpack.c.l.b16 %v2338
        %v2347 = vunpack.c.l.b16 %v2339
        %v2348 = vunpack.c.l.b16 %v2340
        %v2349 = vpack.c.b16 %v2346, %v2345
        %v2350 = vpack.c.b16 %v2348, %v2347
        %vm2353 = vcmask 261120
        %v2355 = vsel %vm2353, %v2336, 0
        %2357 = vmatpush.bf16.msra.mxu0 0
        %2358 = vmatpush.bf16.msra.mxu0 0
        %2359 = vmatpush.bf16.msra.mxu0 0
        %2360 = vmatpush.bf16.msra.mxu0 0
        %2361 = vmatpush.bf16.msra.mxu0 0
        %2362 = vmatpush.bf16.msra.mxu0 0
        %2363 = vmatpush.bf16.msra.mxu0 %v2350
        %2364 = vmatpush.bf16.msra.mxu0 %v2349
        %2365 = vmatmul.bf16.gmra.mxu0 %v2355
        %v2366 = vpop.f32.mrf.mxu0
        %v2367 = vadd.f32 0.0, %v2366
        %v2368 = vpop.f32.mrf.mxu0
        %2369 = vdwg.mxu0
        %v2370 = vlaneseq
        %v2371 = vand.u32 %v2370, 127
        %vm2372 = vcmp.lt.s32.totalorder %v2371, 10
        %v2373 = vsel %vm2372, %v2367, -1e+30
        %v2374 = vsel %vm1780, %v2373, -inf
        %2375 = vmax.xlane.f32.xlu0 %v2374
        %v2376 = vpop.xlane.xlu0 %2375
        %v2377 = vsub.f32 %v2373, %v2376
        %v2378 = vmul.f32 %v2377, 1.442695
        %v2379 = vpow.pop %v2378
        %v2380 = vsel %vm2372, %v2379, 0.0
        %v2381 = vsel %vm1780, %v2380, 0.0
        %2382 = vadd.xlane.f32.xlu0 %v2381
        %v2383 = vpop.xlane.xlu0 %2382
        %v2384 = vlog2.pop %v2383
        %v2385 = vmul.f32 %v2384, 0.6931472
        %v2386 = vsub.f32 %v2377, %v2385
        %v2387 = vsel %vm2372, %v2386, 0.0
        %2388 = vst [vmem:[%s622] sm:$0xf] %v2387
        %s2389 = sand.u32 %s467, 1
        %s2390 = scalar_lea.sflag [#allocation3], %s2389
        %s2391 = sand.u32 %s467, 1
        %s2392 = smul.addr %s2391, 4
        %s2393 = scalar_lea.vmem [#allocation2], %s2392
        // Predicated region
        $region101: #{net_forward.1} parent=99 // pred_check
          %p2394 = pneg %p477
        $region102: #{net_forward.1} parent=99 // pred_check_branch
          %2396 = sbr.rel (%p2394) target = $region104
        $region103: #{net_forward.1} parent=99 // pred_region
          %2398 = vsyncadd %s2390, 0
          %s2399 = smul.addr %s34, 4
          %s2400 = scalar_lea.hbm %s20, %s2399
          %s2402 = sshll.u32 %s2393, 4
          %s2403 = int_to_ptr.vmem [resolvable:$true] %s2402
          %s2404 = sshll.u32 %s2400, 4
          %s2405 = int_to_ptr.hbm [resolvable:$true] %s2404
          %2407 = dma.vmem_to_hbm [thread:$0]  %s2403, 64, %s2405, %s2390
        $region104: #{net_forward.1} parent=99 // pred_fallthru
          _
      $region100: #{net_forward.1} parent=5 // pred_fallthru
        _
      %p2408 = scmp.le.s32.totalorder 2, %s29
      // Predicated region
      $region105: #{net_forward.1} parent=5 // pred_check
        %p2409 = pneg %p2408
      $region106: #{net_forward.1} parent=5 // pred_check_branch
        %2411 = sbr.rel (%p2409) target = $region108
      $region107: #{net_forward.1} parent=5 // pred_region
        %s2412 = ssub.s32 %s29, 2
        // Predicated region
        $region109: #{net_forward.1} parent=107 // pred_check
          %p2413 = pneg %p483
        $region110: #{net_forward.1} parent=107 // pred_check_branch
          %2415 = sbr.rel (%p2413) target = $region112
        $region111: #{net_forward.1} parent=107 // pred_region
          %s2416 = sand.u32 %s468, 1
          %s2417 = scalar_lea.sflag [#allocation3], %s2416
          %s2418 = sand.u32 %s468, 1
          %s2419 = smul.addr %s2418, 4
          %s2420 = scalar_lea.vmem [#allocation2], %s2419
          %2422 = dma.done %s2417, 64
        $region112: #{net_forward.1} parent=107 // pred_fallthru
          _
      $region108: #{net_forward.1} parent=5 // pred_fallthru
        _
    $region6: #{net_forward.1} parent=1 // loop_footer
      %s33 = sadd.s32 1, %s29
    $region7: #{net_forward.1} parent=1 // loop_footer_branch
      %28 = sbr.rel target = $region3
    $region8: #{net_forward.1} parent=1 // loop_exit
      _
    %2423 = vsyncpa [#allocation3], 1
    %s2424 = scalar_lea.sflag [#allocation3], 1
    %2425 = vsyncpa %s2424, 1

</llo_original>
